<compile_context>
chip_gen: v6e
topology: v6e:2x2x1
jax: 0.10.0
libtpu: 0.0.40
codegen_flags: <defaults>
</compile_context>

<pallas_src>
import functools

import jax
import jax.numpy as jnp
from jax import lax
from jax.experimental import pallas as pl
from jax.experimental.pallas import tpu as pltpu

BN_EPS = 1e-5
LANES = 128  # lane-dense padded feature width


# ---------------------------------------------------------------------------
# Kernel
# ---------------------------------------------------------------------------
def gin_layer_kernel(adj_ref,   # VMEM (TM, N)   bf16 : streamed row block of (Adj + (1+eps) I)
                     h_ref,     # VMEM (N, Fp)   bf16 : resident node features (zero-padded)
                     w_ref,     # VMEM (2Fp, Fp) bf16 : rows [0:Fp)=W1, [Fp:2Fp)=W2 (zero-padded)
                     bn_ref,    # VMEM (4, Fp)   f32  : g1, beta1, g2, beta2 (gamma padded with 0)
                     o_ref,     # VMEM (N, Fp)   bf16 : resident output, written at last step
                     z1_ref,    # VMEM (N, Fp)   f32  scratch: full pre-BN hidden activations
                     stat_ref): # VMEM (2, Fp)   f32  scratch: [sum(z1); sum(z1*z1)]
    i = pl.program_id(0)
    nblk = pl.num_programs(0)
    tm = adj_ref.shape[0]
    fp = w_ref.shape[1]
    n_nodes = z1_ref.shape[0]  # static

    @pl.when(i == 0)
    def _init():
        stat_ref[...] = jnp.zeros_like(stat_ref)

    # --- streamed row block: pooled_i = (Adj + (1+eps) I)[rows i] @ h  (bf16 MXU, f32 acc) ---
    pooled = jnp.dot(adj_ref[...], h_ref[...], preferred_element_type=jnp.float32)

    # --- MLP hidden Linear (bias cancels under batch-stat BN) ---
    z1 = jnp.dot(pooled.astype(jnp.bfloat16), w_ref[0:fp, :],
                 preferred_element_type=jnp.float32)

    row0 = pl.multiple_of(i * tm, tm)
    z1_ref[pl.ds(row0, tm), :] = z1

    # --- single-pass BN1 statistics accumulation (f32) ---
    stat_ref[0:1, :] += jnp.sum(z1, axis=0, keepdims=True)
    stat_ref[1:2, :] += jnp.sum(z1 * z1, axis=0, keepdims=True)

    # --- epilogue: finalize BN1, ReLU, output Linear, BN2, ReLU, store ---
    @pl.when(i == nblk - 1)
    def _finalize():
        inv_n = 1.0 / float(n_nodes)
        mean1 = stat_ref[0:1, :] * inv_n
        var1 = stat_ref[1:2, :] * inv_n - mean1 * mean1       # biased var (PyTorch BN fwd)
        scale1 = bn_ref[0:1, :] * lax.rsqrt(var1 + BN_EPS)    # folded BN affine
        shift1 = bn_ref[1:2, :] - scale1 * mean1
        h1 = jnp.maximum(z1_ref[...] * scale1 + shift1, 0.0)

        z2 = jnp.dot(h1.astype(jnp.bfloat16), w_ref[fp:2 * fp, :],
                     preferred_element_type=jnp.float32)

        mean2 = jnp.mean(z2, axis=0, keepdims=True)
        var2 = jnp.mean(z2 * z2, axis=0, keepdims=True) - mean2 * mean2
        scale2 = bn_ref[2:3, :] * lax.rsqrt(var2 + BN_EPS)
        shift2 = bn_ref[3:4, :] - scale2 * mean2
        o_ref[...] = jnp.maximum(z2 * scale2 + shift2, 0.0).astype(o_ref.dtype)


# ---------------------------------------------------------------------------
# One-time preparation (outside the per-call hot path; reuse across forward calls)
# ---------------------------------------------------------------------------
def prepare_adjacency(adj, eps):
    """Fold the (1+eps) self-term into the adjacency diagonal and cast to bf16.

    (Adj + (1+eps) I) @ h  ==  Adj @ h + (1+eps) h exactly, so the in-kernel residual
    add disappears and h only needs a bf16 path.  0/1 adjacency is exact in bf16; the
    only rounding is (1+eps) -> bf16 on the diagonal.  Recompute only when the learned
    per-layer eps changes (i.e. once per optimizer step), not per forward call."""
    n = adj.shape[0]
    a = adj.astype(jnp.float32) + (1.0 + jnp.float32(eps)) * jnp.eye(n, dtype=jnp.float32)
    return a.astype(jnp.bfloat16)


def prepare_features(h, lanes=LANES):
    """Zero-pad features to a lane-dense (N, 128) bf16 slab (done once per layer input)."""
    n, f = h.shape
    assert f <= lanes
    return jnp.pad(h, ((0, 0), (0, lanes - f))).astype(jnp.bfloat16)


def pack_params(params, f_in, f_out, lanes=LANES):
    """Pack the 4 weight/BN tensors into two contiguous slabs (2 DMAs instead of 8).

    Weight rows/cols are zero-padded so padded lanes are exactly transparent; gamma is
    padded with 0.0 so padded output columns stay exactly 0 through BN + ReLU."""
    assert f_in <= lanes and f_out <= lanes
    w1_p = jnp.pad(params["w1"], ((0, lanes - f_in), (0, lanes - f_out)))
    w2_p = jnp.pad(params["w2"], ((0, lanes - f_out), (0, lanes - f_out)))
    w_slab = jnp.concatenate([w1_p, w2_p], axis=0).astype(jnp.bfloat16)       # (2*lanes, lanes)

    def _pad(v):
        return jnp.pad(v, ((0, 0), (0, lanes - v.shape[1])))                  # zero-pad

    bn_slab = jnp.concatenate(
        [_pad(params["bn1_gamma"]), _pad(params["bn1_beta"]),
         _pad(params["bn2_gamma"]), _pad(params["bn2_beta"])],
        axis=0).astype(jnp.float32)                                           # (4, lanes)
    return w_slab, bn_slab


# ---------------------------------------------------------------------------
# Wrapper
# ---------------------------------------------------------------------------
def _choose_tm(n):
    """Largest row tile dividing N whose double-buffered bf16 adj stream stays ~<= 8 MiB."""
    tiles = [t for t in (512, 256, 128, 64, 32, 16, 8) if n % t == 0]
    if not tiles:
        raise ValueError("node count must be a multiple of 8")
    for t in tiles:
        if 2 * t * n * 2 <= (8 << 20):
            return t
    return tiles[-1]


def _vmem_limit_bytes(n, fp, tm):
    adj_stream = 2 * tm * n * 2              # bf16 row block, double-buffered
    resident = 2 * (n * fp * 2 + n * fp * 2)  # h + out (bf16), conservative x2 buffering
    z1_scratch = n * fp * 4                   # f32 scratch
    epilogue = 3 * n * fp * 4                 # compiler temporaries in the finalize branch
    weights = 2 * (2 * fp * fp * 2 + 4 * fp * 4)
    est = adj_stream + resident + z1_scratch + epilogue + weights + 2 * fp * 4
    return int(min(100 << 20, max(32 << 20, 2 * est)))


@functools.partial(jax.jit, static_argnames=("tm",))
def gin_layer(h_p, adj_prepped, w_slab, bn_slab, *, tm=None):
    """Runs the whole GIN layer in one row-block-gridded Pallas invocation.

    h_p:         (N, 128) bf16 zero-padded node features   (prepare_features)
    adj_prepped: (N, N)   bf16 adjacency with (1+eps) diag (prepare_adjacency)
    w_slab:      (256, 128) bf16 packed [W1; W2]           (pack_params)
    bn_slab:     (4, 128)  f32  packed [g1; b1; g2; b2]    (pack_params)

    Returns the padded (N, 128) bf16 output slab (slice [:, :f_out] only if needed --
    the next GIN layer consumes the padded bf16 layout directly)."""
    n, fp = h_p.shape
    assert fp == LANES
    assert adj_prepped.shape == (n, n)
    assert n % 8 == 0, "pad node count to a multiple of 8"
    if tm is None:
        tm = _choose_tm(n)
    assert n % tm == 0 and tm % 8 == 0
    n_blocks = n // tm

    grid_spec = pltpu.PrefetchScalarGridSpec(
        num_scalar_prefetch=0,
        grid=(n_blocks,),
        in_specs=[
            pl.BlockSpec((tm, n), lambda i: (i, 0)),        # adj row block: streamed/pipelined
            pl.BlockSpec((n, fp), lambda i: (0, 0)),        # h: resident
            pl.BlockSpec((2 * fp, fp), lambda i: (0, 0)),   # weight slab: resident
            pl.BlockSpec((4, fp), lambda i: (0, 0)),        # BN slab: resident
        ],
        out_specs=pl.BlockSpec((n, fp), lambda i: (0, 0)),  # output: resident, final write only
        scratch_shapes=[
            pltpu.VMEM((n, fp), jnp.float32),               # z1 (pre-BN hidden activations)
            pltpu.VMEM((2, fp), jnp.float32),               # [sum(z1); sum(z1^2)] accumulators
        ],
    )

    return pl.pallas_call(
        gin_layer_kernel,
        out_shape=jax.ShapeDtypeStruct((n, fp), jnp.bfloat16),
        grid_spec=grid_spec,
        compiler_params=pltpu.CompilerParams(
            # BN statistics carry across row blocks -> the axis is a reduction.
            dimension_semantics=("arbitrary",),
            vmem_limit_bytes=_vmem_limit_bytes(n, fp, tm),
        ),
    )(adj_prepped, h_p, w_slab, bn_slab)


# ---------------------------------------------------------------------------
# Synthetic parameters + references
# ---------------------------------------------------------------------------
def make_params(key, f_in, f_out):
    """Shapes from GraphIsomorphismLayer.__init__ with num_mlp_layers=2:
    MLP = Linear(f_in,f_out) -> BN -> ReLU -> Linear(f_out,f_out), plus layer-level BN.
    Biases b1/b2 are kept for the exact reference but not fed to the kernel
    (they cancel exactly under batch-statistic BatchNorm)."""
    ks = jax.random.split(key, 8)
    s1 = 1.0 / jnp.sqrt(f_in)
    s2 = 1.0 / jnp.sqrt(f_out)
    return dict(
        w1=jax.random.uniform(ks[0], (f_in, f_out), jnp.float32, -s1, s1),
        b1=jax.random.uniform(ks[1], (1, f_out), jnp.float32, -s1, s1),
        bn1_gamma=jax.random.uniform(ks[2], (1, f_out), jnp.float32, 0.5, 1.5),
        bn1_beta=jax.random.uniform(ks[3], (1, f_out), jnp.float32, -0.5, 0.5),
        w2=jax.random.uniform(ks[4], (f_out, f_out), jnp.float32, -s2, s2),
        b2=jax.random.uniform(ks[5], (1, f_out), jnp.float32, -s2, s2),
        bn2_gamma=jax.random.uniform(ks[6], (1, f_out), jnp.float32, 0.5, 1.5),
        bn2_beta=jax.random.uniform(ks[7], (1, f_out), jnp.float32, -0.5, 0.5),
    )


def gin_layer_ref_f32(h, adj, p, eps):
    """Pure-JAX f32 reference with the original module's exact arithmetic (incl. biases)."""
    pooled = adj @ h + (1.0 + eps) * h
    z1 = pooled @ p["w1"] + p["b1"]
    m1, v1 = jnp.mean(z1, 0, keepdims=True), jnp.var(z1, 0, keepdims=True)
    h1 = jax.nn.relu(p["bn1_gamma"] * (z1 - m1) / jnp.sqrt(v1 + BN_EPS) + p["bn1_beta"])
    z2 = h1 @ p["w2"] + p["b2"]
    m2, v2 = jnp.mean(z2, 0, keepdims=True), jnp.var(z2, 0, keepdims=True)
    return jax.nn.relu(p["bn2_gamma"] * (z2 - m2) / jnp.sqrt(v2 + BN_EPS) + p["bn2_beta"])


def gin_layer_ref_bf16(h, adj_prepped_bf16, p):
    """Pure-JAX reference mirroring the kernel's arithmetic: (1+eps) folded into the bf16
    adjacency diagonal, bf16 MXU inputs / f32 accumulation, biases dropped, single-pass
    biased variance, bf16 output cast."""
    bf = jnp.bfloat16
    pooled = jnp.dot(adj_prepped_bf16, h.astype(bf), preferred_element_type=jnp.float32)
    z1 = jnp.dot(pooled.astype(bf), p["w1"].astype(bf), preferred_element_type=jnp.float32)
    m1 = jnp.mean(z1, 0, keepdims=True)
    v1 = jnp.mean(z1 * z1, 0, keepdims=True) - m1 * m1
    h1 = jax.nn.relu(p["bn1_gamma"] * (z1 - m1) * lax.rsqrt(v1 + BN_EPS) + p["bn1_beta"])
    z2 = jnp.dot(h1.astype(bf), p["w2"].astype(bf), preferred_element_type=jnp.float32)
    m2 = jnp.mean(z2, 0, keepdims=True)
    v2 = jnp.mean(z2 * z2, 0, keepdims=True) - m2 * m2
    out = jax.nn.relu(p["bn2_gamma"] * (z2 - m2) * lax.rsqrt(v2 + BN_EPS) + p["bn2_beta"])
    return out.astype(bf)


# ---------------------------------------------------------------------------
# Demo / correctness check
# ---------------------------------------------------------------------------
if __name__ == "__main__":
    N, F_IN, F_OUT, TM = 512, 32, 32, 128   # 4 row blocks -> exercises the pipelined grid
    key = jax.random.PRNGKey(0)
    k_h, k_adj, k_p = jax.random.split(key, 3)

    h = jax.random.normal(k_h, (N, F_IN), jnp.float32)
    # Symmetric 0/1 adjacency, self-loops removed (dense stand-in for torch.spmm's sparse Adj).
    a = (jax.random.uniform(k_adj, (N, N)) < 0.1).astype(jnp.float32)
    adj = jnp.maximum(a, a.T) * (1.0 - jnp.eye(N, dtype=jnp.float32))

    params = make_params(k_p, F_IN, F_OUT)
    eps_val = 0.1  # eps[layer_num]

    # One-time prep (reused across forward calls; adj re-prep only when eps changes).
    adj_prepped = prepare_adjacency(adj, eps_val)
    h_p = prepare_features(h)
    w_slab, bn_slab = pack_params(params, F_IN, F_OUT)

    out_padded = gin_layer(h_p, adj_prepped, w_slab, bn_slab, tm=TM)
    out_padded = jax.block_until_ready(out_padded)
    assert out_padded.shape == (N, LANES) and out_padded.dtype == jnp.bfloat16
    assert bool(jnp.all(jnp.isfinite(out_padded.astype(jnp.float32))))
    # Padded lanes must be exactly zero (gamma padded with 0).
    assert bool(jnp.all(out_padded[:, F_OUT:] == 0))

    out = out_padded[:, :F_OUT].astype(jnp.float32)

    # Tight check vs a reference that mirrors the kernel's bf16-MXU / folded-eps arithmetic.
    ref_match = gin_layer_ref_bf16(h, adj_prepped, params).astype(jnp.float32)
    assert jnp.allclose(out, ref_match, atol=2e-2, rtol=2e-2), \
        "mismatch vs bf16-matched reference"

    # Looser global check vs the exact f32 module semantics (bf16 inputs + bf16 output cast).
    ref_f32 = gin_layer_ref_f32(h, adj, params, eps_val)
    rel_err = jnp.linalg.norm(out - ref_f32) / (jnp.linalg.norm(ref_f32) + 1e-12)
    assert float(rel_err) < 0.05, f"relative error vs f32 reference too large: {float(rel_err)}"

    print("KERNEL_OK")
</pallas_src>

<mosaic_0001>
module attributes {stable_mosaic.version = 11 : i64} {
  func.func @gin_layer_kernel(%arg0: i32, %arg1: memref<128x512xbf16, #tpu.memory_space<vmem>>, %arg2: memref<512x128xbf16, #tpu.memory_space<vmem>>, %arg3: memref<256x128xbf16, #tpu.memory_space<vmem>>, %arg4: memref<4x128xf32, #tpu.memory_space<vmem>>, %arg5: memref<512x128xbf16, #tpu.memory_space<vmem>>, %arg6: memref<512x128xf32, #tpu.memory_space<vmem>>, %arg7: memref<2x128xf32, #tpu.memory_space<vmem>>) attributes {dimension_semantics = [#tpu.dimension_semantics<arbitrary>], iteration_bounds = array<i64: 4>, scalar_prefetch = 0 : i64, scratch_operands = 2 : i64, tpu.core_type = #tpu.core_type<tc>, window_params = [{transform_indices = @transform_0, window_bounds = array<i64: 128, 512>}, {pipeline_mode = #tpu.pipeline_mode<synchronous>, transform_indices = @transform_1, window_bounds = array<i64: 512, 128>}, {pipeline_mode = #tpu.pipeline_mode<synchronous>, transform_indices = @transform_2, window_bounds = array<i64: 256, 128>}, {pipeline_mode = #tpu.pipeline_mode<synchronous>, transform_indices = @transform_3, window_bounds = array<i64: 4, 128>}, {pipeline_mode = #tpu.pipeline_mode<synchronous>, transform_indices = @transform_4, window_bounds = array<i64: 512, 128>}]} {
    %c0_i32 = arith.constant 0 : i32
    %0 = arith.cmpi eq, %arg0, %c0_i32 : i32
    %1 = arith.extui %0 : i1 to i32
    %c0_i32_0 = arith.constant 0 : i32
    %2 = arith.cmpi ne, %1, %c0_i32_0 : i32
    scf.if %2 {
      %cst_18 = arith.constant 0.000000e+00 : f32
      %27 = vector.broadcast %cst_18 : f32 to vector<2x128xf32>
      %c0_19 = arith.constant 0 : index
      %c0_20 = arith.constant 0 : index
      %28 = vector.load %arg7[%c0_19, %c0_20] : memref<2x128xf32, #tpu.memory_space<vmem>>, vector<2x128xf32>
      tpu.vector_store %arg7[%c0_19, %c0_20], %27 {strides = array<i32>} : memref<2x128xf32, #tpu.memory_space<vmem>>, vector<2x128xf32>,
    } else {
    }
    %c0 = arith.constant 0 : index
    %c0_1 = arith.constant 0 : index
    %3 = vector.load %arg1[%c0, %c0_1] : memref<128x512xbf16, #tpu.memory_space<vmem>>, vector<128x512xbf16>
    %c0_2 = arith.constant 0 : index
    %c0_3 = arith.constant 0 : index
    %4 = vector.load %arg2[%c0_2, %c0_3] : memref<512x128xbf16, #tpu.memory_space<vmem>>, vector<512x128xbf16>
    %cst = arith.constant dense<0.000000e+00> : vector<128x128xf32>
    %5 = tpu.matmul %3, %4, %cst {dimension_numbers = #tpu.dot_dimension_numbers<[1], [0], [0], [1], [0, 0, 1, 1], [], []>} : vector<128x512xbf16>, vector<512x128xbf16>, vector<128x128xf32> -> vector<128x128xf32>
    %6 = arith.truncf %5 : vector<128x128xf32> to vector<128x128xbf16>
    %c0_4 = arith.constant 0 : index
    %c0_5 = arith.constant 0 : index
    %7 = vector.load %arg3[%c0_4, %c0_5] : memref<256x128xbf16, #tpu.memory_space<vmem>>, vector<128x128xbf16>
    %cst_6 = arith.constant dense<0.000000e+00> : vector<128x128xf32>
    %8 = tpu.matmul %6, %7, %cst_6 {dimension_numbers = #tpu.dot_dimension_numbers<[1], [0], [0], [1], [0, 0, 1, 1], [], []>} : vector<128x128xbf16>, vector<128x128xbf16>, vector<128x128xf32> -> vector<128x128xf32>
    %c128_i32 = arith.constant 128 : i32
    %9 = arith.muli %arg0, %c128_i32 : i32
    %10 = tpu.assume_multiple %9, 128 : i32
    %11 = arith.index_cast %10 : i32 to index
    %c0_7 = arith.constant 0 : index
    %12 = vector.load %arg6[%11, %c0_7] : memref<512x128xf32, #tpu.memory_space<vmem>>, vector<128x128xf32>
    tpu.vector_store %arg6[%11, %c0_7], %8 {strides = array<i32>} : memref<512x128xf32, #tpu.memory_space<vmem>>, vector<128x128xf32>,
    %c0_8 = arith.constant 0 : index
    %c0_9 = arith.constant 0 : index
    %13 = vector.load %arg7[%c0_8, %c0_9] : memref<2x128xf32, #tpu.memory_space<vmem>>, vector<1x128xf32>
    %cst_10 = arith.constant dense<0.000000e+00> : vector<128xf32>
    %14 = vector.multi_reduction <add>, %8, %cst_10 [0] : vector<128x128xf32> to vector<128xf32>
    %15 = vector.shape_cast %14 : vector<128xf32> to vector<1x128xf32>
    %16 = arith.addf %13, %15 : vector<1x128xf32>
    %c0_11 = arith.constant 0 : index
    %c0_12 = arith.constant 0 : index
    %17 = vector.load %arg7[%c0_11, %c0_12] : memref<2x128xf32, #tpu.memory_space<vmem>>, vector<1x128xf32>
    tpu.vector_store %arg7[%c0_11, %c0_12], %16 {strides = array<i32>} : memref<2x128xf32, #tpu.memory_space<vmem>>, vector<1x128xf32>,
    %c1 = arith.constant 1 : index
    %c0_13 = arith.constant 0 : index
    %18 = vector.load %arg7[%c1, %c0_13] : memref<2x128xf32, #tpu.memory_space<vmem>>, vector<1x128xf32>
    %19 = arith.mulf %8, %8 : vector<128x128xf32>
    %cst_14 = arith.constant dense<0.000000e+00> : vector<128xf32>
    %20 = vector.multi_reduction <add>, %19, %cst_14 [0] : vector<128x128xf32> to vector<128xf32>
    %21 = vector.shape_cast %20 : vector<128xf32> to vector<1x128xf32>
    %22 = arith.addf %18, %21 : vector<1x128xf32>
    %c1_15 = arith.constant 1 : index
    %c0_16 = arith.constant 0 : index
    %23 = vector.load %arg7[%c1_15, %c0_16] : memref<2x128xf32, #tpu.memory_space<vmem>>, vector<1x128xf32>
    tpu.vector_store %arg7[%c1_15, %c0_16], %22 {strides = array<i32>} : memref<2x128xf32, #tpu.memory_space<vmem>>, vector<1x128xf32>,
    %c3_i32 = arith.constant 3 : i32
    %24 = arith.cmpi eq, %arg0, %c3_i32 : i32
    %25 = arith.extui %24 : i1 to i32
    %c0_i32_17 = arith.constant 0 : i32
    %26 = arith.cmpi ne, %25, %c0_i32_17 : i32
    scf.if %26 {
      %c0_18 = arith.constant 0 : index
      %c0_19 = arith.constant 0 : index
      %27 = vector.load %arg7[%c0_18, %c0_19] : memref<2x128xf32, #tpu.memory_space<vmem>>, vector<1x128xf32>
      %cst_20 = arith.constant 0.001953125 : f32
      %28 = vector.broadcast %cst_20 : f32 to vector<1x128xf32>
      %29 = arith.mulf %27, %28 : vector<1x128xf32>
      %c1_21 = arith.constant 1 : index
      %c0_22 = arith.constant 0 : index
      %30 = vector.load %arg7[%c1_21, %c0_22] : memref<2x128xf32, #tpu.memory_space<vmem>>, vector<1x128xf32>
      %cst_23 = arith.constant 0.001953125 : f32
      %31 = vector.broadcast %cst_23 : f32 to vector<1x128xf32>
      %32 = arith.mulf %30, %31 : vector<1x128xf32>
      %33 = arith.mulf %29, %29 : vector<1x128xf32>
      %34 = arith.subf %32, %33 : vector<1x128xf32>
      %c0_24 = arith.constant 0 : index
      %c0_25 = arith.constant 0 : index
      %35 = vector.load %arg4[%c0_24, %c0_25] : memref<4x128xf32, #tpu.memory_space<vmem>>, vector<1x128xf32>
      %cst_26 = arith.constant 9.99999974E-6 : f32
      %36 = vector.broadcast %cst_26 : f32 to vector<1x128xf32>
      %37 = arith.addf %34, %36 : vector<1x128xf32>
      %38 = math.rsqrt %37 : vector<1x128xf32>
      %39 = arith.mulf %35, %38 : vector<1x128xf32>
      %c1_27 = arith.constant 1 : index
      %c0_28 = arith.constant 0 : index
      %40 = vector.load %arg4[%c1_27, %c0_28] : memref<4x128xf32, #tpu.memory_space<vmem>>, vector<1x128xf32>
      %41 = arith.mulf %39, %29 : vector<1x128xf32>
      %42 = arith.subf %40, %41 : vector<1x128xf32>
      %c0_29 = arith.constant 0 : index
      %c0_30 = arith.constant 0 : index
      %43 = vector.load %arg6[%c0_29, %c0_30] : memref<512x128xf32, #tpu.memory_space<vmem>>, vector<512x128xf32>
      %44 = vector.broadcast %39 : vector<1x128xf32> to vector<512x128xf32>
      %45 = arith.mulf %43, %44 : vector<512x128xf32>
      %46 = vector.broadcast %42 : vector<1x128xf32> to vector<512x128xf32>
      %47 = arith.addf %45, %46 : vector<512x128xf32>
      %cst_31 = arith.constant 0.000000e+00 : f32
      %48 = vector.broadcast %cst_31 : f32 to vector<512x128xf32>
      %49 = arith.maximumf %47, %48 : vector<512x128xf32>
      %50 = arith.truncf %49 : vector<512x128xf32> to vector<512x128xbf16>
      %c128 = arith.constant 128 : index
      %c0_32 = arith.constant 0 : index
      %51 = vector.load %arg3[%c128, %c0_32] : memref<256x128xbf16, #tpu.memory_space<vmem>>, vector<128x128xbf16>
      %cst_33 = arith.constant dense<0.000000e+00> : vector<512x128xf32>
      %52 = tpu.matmul %50, %51, %cst_33 {dimension_numbers = #tpu.dot_dimension_numbers<[1], [0], [0], [1], [0, 0, 1, 1], [], []>} : vector<512x128xbf16>, vector<128x128xbf16>, vector<512x128xf32> -> vector<512x128xf32>
      %cst_34 = arith.constant dense<0.000000e+00> : vector<128xf32>
      %53 = vector.multi_reduction <add>, %52, %cst_34 [0] : vector<512x128xf32> to vector<128xf32>
      %54 = vector.shape_cast %53 : vector<128xf32> to vector<1x128xf32>
      %cst_35 = arith.constant 5.120000e+02 : f32
      %55 = vector.broadcast %cst_35 : f32 to vector<1x128xf32>
      %56 = arith.divf %54, %55 : vector<1x128xf32>
      %57 = arith.mulf %52, %52 : vector<512x128xf32>
      %cst_36 = arith.constant dense<0.000000e+00> : vector<128xf32>
      %58 = vector.multi_reduction <add>, %57, %cst_36 [0] : vector<512x128xf32> to vector<128xf32>
      %59 = vector.shape_cast %58 : vector<128xf32> to vector<1x128xf32>
      %cst_37 = arith.constant 5.120000e+02 : f32
      %60 = vector.broadcast %cst_37 : f32 to vector<1x128xf32>
      %61 = arith.divf %59, %60 : vector<1x128xf32>
      %62 = arith.mulf %56, %56 : vector<1x128xf32>
      %63 = arith.subf %61, %62 : vector<1x128xf32>
      %c2 = arith.constant 2 : index
      %c0_38 = arith.constant 0 : index
      %64 = vector.load %arg4[%c2, %c0_38] : memref<4x128xf32, #tpu.memory_space<vmem>>, vector<1x128xf32>
      %cst_39 = arith.constant 9.99999974E-6 : f32
      %65 = vector.broadcast %cst_39 : f32 to vector<1x128xf32>
      %66 = arith.addf %63, %65 : vector<1x128xf32>
      %67 = math.rsqrt %66 : vector<1x128xf32>
      %68 = arith.mulf %64, %67 : vector<1x128xf32>
      %c3 = arith.constant 3 : index
      %c0_40 = arith.constant 0 : index
      %69 = vector.load %arg4[%c3, %c0_40] : memref<4x128xf32, #tpu.memory_space<vmem>>, vector<1x128xf32>
      %70 = arith.mulf %68, %56 : vector<1x128xf32>
      %71 = arith.subf %69, %70 : vector<1x128xf32>
      %72 = vector.broadcast %68 : vector<1x128xf32> to vector<512x128xf32>
      %73 = arith.mulf %52, %72 : vector<512x128xf32>
      %74 = vector.broadcast %71 : vector<1x128xf32> to vector<512x128xf32>
      %75 = arith.addf %73, %74 : vector<512x128xf32>
      %cst_41 = arith.constant 0.000000e+00 : f32
      %76 = vector.broadcast %cst_41 : f32 to vector<512x128xf32>
      %77 = arith.maximumf %75, %76 : vector<512x128xf32>
      %78 = arith.truncf %77 : vector<512x128xf32> to vector<512x128xbf16>
      %c0_42 = arith.constant 0 : index
      %c0_43 = arith.constant 0 : index
      %79 = vector.load %arg5[%c0_42, %c0_43] : memref<512x128xbf16, #tpu.memory_space<vmem>>, vector<512x128xbf16>
      tpu.vector_store %arg5[%c0_42, %c0_43], %78 {strides = array<i32>} : memref<512x128xbf16, #tpu.memory_space<vmem>>, vector<512x128xbf16>,
    } else {
    }
    return
  }
  func.func @transform_0(%arg0: i32) -> (i32, i32) {
    %c0_i32 = arith.constant 0 : i32
    %c0_i32_0 = arith.constant 0 : i32
    return %arg0, %c0_i32 : i32, i32
  }
  func.func @transform_1(%arg0: i32) -> (i32, i32) {
    %c0_i32 = arith.constant 0 : i32
    %c0_i32_0 = arith.constant 0 : i32
    %c0_i32_1 = arith.constant 0 : i32
    return %c0_i32, %c0_i32_0 : i32, i32
  }
  func.func @transform_2(%arg0: i32) -> (i32, i32) {
    %c0_i32 = arith.constant 0 : i32
    %c0_i32_0 = arith.constant 0 : i32
    %c0_i32_1 = arith.constant 0 : i32
    return %c0_i32, %c0_i32_0 : i32, i32
  }
  func.func @transform_3(%arg0: i32) -> (i32, i32) {
    %c0_i32 = arith.constant 0 : i32
    %c0_i32_0 = arith.constant 0 : i32
    %c0_i32_1 = arith.constant 0 : i32
    return %c0_i32, %c0_i32_0 : i32, i32
  }
  func.func @transform_4(%arg0: i32) -> (i32, i32) {
    %c0_i32 = arith.constant 0 : i32
    %c0_i32_0 = arith.constant 0 : i32
    %c0_i32_1 = arith.constant 0 : i32
    return %c0_i32, %c0_i32_0 : i32, i32
  }
}

</mosaic_0001>

<llo_original>
// kernel: gin_layer.1
$region0: #{gin_layer.1}
  #allocation0 [shape = 'u32[]', space=smem, size = 0x4, offset = 0x4, fixed_abs, tag = 'smem constant byte address 0x4 - core index']
  #allocation1 [shape = 'u32[144,128]{1,0:T(1,128)}', space=vmem, size = 0x12000, scoped, tag = 'internal scratch']
  #allocation2 [shape = 'f32[512,128]{1,0:T(8,128)}', space=vmem, size = 0x40000, scoped, tag = 'scratch operand']
  #allocation3 [shape = 'f32[2,128]{1,0:T(2,128)}', space=vmem, size = 0x400, scoped, tag = 'scratch operand']
  %s0 = inlined_call_operand.hbm [shape: bf16[512,512], index: 0, kind: input, shape index: {}]
  %s1 = inlined_call_operand.hbm [shape: bf16[512,128], index: 1, kind: input, shape index: {}]
  %s2 = inlined_call_operand.hbm [shape: bf16[256,128], index: 2, kind: input, shape index: {}]
  %s3 = inlined_call_operand.vmem [shape: f32[4,128], index: 3, kind: input, shape index: {}]
  %s4 = inlined_call_operand.hbm [shape: bf16[512,128], index: 4, kind: output, shape index: {}]
  %s5 = sld [smem:[#allocation0]]
  $region69: #{gin_layer.1} parent=0
    _
  %s7 = ssub.s32 1, %s5
  %s8 = scalar_select 0, %s7, %s5
  $region1: #{gin_layer.1} parent=0
    #allocation4 [shape = 'u8[262144]{0}', space=vmem, size = 0x40000, scoped, tag = 'input window, operand 0']
    #allocation5 [shape = 's32[2]{0}', space=sflag, size = 0x8, scoped, tag = 'scoped memory for gin_layer.1']
    #allocation6 [shape = 's32[2]{0}', space=sflag, size = 0x8, scoped, tag = 'scoped memory for gin_layer.1']
    #allocation7 [shape = 'u8[131072]{0}', space=vmem, size = 0x20000, scoped, tag = 'input window, operand 1, single buffered']
    #allocation8 [shape = 's32[1]{0}', space=sflag, size = 0x4, scoped, tag = 'scoped memory for gin_layer.1']
    #allocation9 [shape = 'u8[65536]{0}', space=vmem, size = 0x10000, scoped, tag = 'input window, operand 2, single buffered']
    #allocation10 [shape = 'u8[131072]{0}', space=vmem, size = 0x20000, scoped, tag = 'output window, operand 0, single buffered']
    %9 = vsyncpa [#allocation5], 0
    %s10 = scalar_lea.sflag [#allocation5], 1
    %11 = vsyncpa %s10, 0
    %12 = vsyncpa [#allocation8], 0
    %13 = vsyncpa [#allocation6], 0
    loop: start=0, step=1, limit=6
    $region2: #{gin_layer.1} parent=1 // loop_pre_header
      _
    $region3: #{gin_layer.1} parent=1 // loop_header
      %s15 = sphi 0, %s19
      %p16 = scmp.ge.s32.totalorder %s15, 6
      %s25 = sphi 0, %s27
      %s28 = sphi 0, %s25
      %s29 = sphi 0, %s28
      %s45 = sphi 0, %s29
      %s49 = sphi 0, %s49
      %s51 = sphi 0, %s49
      %s52 = sphi 0, %s51
      %s66 = sphi 0, %s52
      %s70 = sphi 0, %s70
      %s72 = sphi 0, %s70
      %s73 = sphi 0, %s72
      %s87 = sphi 0, %s73
      %s91 = sphi 0, %s91
      %s93 = sphi 0, %s91
      %s94 = sphi 0, %s93
      %s108 = sphi 0, %s94
      %s112 = sphi 0, %s112
      %s114 = sphi 0, %s112
      %s115 = sphi 0, %s114
      %s129 = sphi 0, %s115
    $region4: #{gin_layer.1} parent=1 // loop_header_branch
      %18 = sbr.rel (%p16) target = $region8
    $region5: #{gin_layer.1} parent=1 // loop_body
      %s20 = ssub.s32 %s15, 1
      %s21 = ssub.s32 %s15, 2
      %s22 = sadd.s32 %s15, 1
      %s23 = ssub.s32 %s15, %s22
      %p24 = scmp.eq.s32.totalorder %s23, 0
      %s26 = sadd.s32 %s25, 1
      %s27 = scalar_select %p24, %s25, %s26
      %p30 = pneg %p24
      %p31 = scmp.eq.s32.totalorder %s15, 3
      %p32 = por %p30, %p31
      %p33 = scmp.ne.s32.totalorder %s25, %s28
      %p34 = scmp.eq.s32.totalorder %s15, 0
      %p35 = por %p33, %p34
      %p36 = scmp.ne.s32.totalorder %s25, %s28
      %p37 = scmp.eq.s32.totalorder %s20, 3
      %p38 = por %p36, %p37
      %p39 = scmp.ne.s32.totalorder %s28, %s29
      %p40 = scmp.eq.s32.totalorder %s20, 0
      %p41 = por %p39, %p40
      %p42 = scmp.ne.s32.totalorder %s28, %s29
      %p43 = scmp.eq.s32.totalorder %s21, 3
      %p44 = por %p42, %p43
      %p46 = scmp.ne.s32.totalorder %s29, %s45
      %p47 = scmp.eq.s32.totalorder %s21, 0
      %p48 = por %p46, %p47
      %s50 = sadd.s32 %s49, 1
      %p53 = scmp.eq.s32.totalorder %s15, 3
      %p54 = scmp.ne.s32.totalorder %s49, %s51
      %p55 = scmp.eq.s32.totalorder %s15, 0
      %p56 = por %p54, %p55
      %p57 = scmp.ne.s32.totalorder %s49, %s51
      %p58 = scmp.eq.s32.totalorder %s20, 3
      %p59 = por %p57, %p58
      %p60 = scmp.ne.s32.totalorder %s51, %s52
      %p61 = scmp.eq.s32.totalorder %s20, 0
      %p62 = por %p60, %p61
      %p63 = scmp.ne.s32.totalorder %s51, %s52
      %p64 = scmp.eq.s32.totalorder %s21, 3
      %p65 = por %p63, %p64
      %p67 = scmp.ne.s32.totalorder %s52, %s66
      %p68 = scmp.eq.s32.totalorder %s21, 0
      %p69 = por %p67, %p68
      %s71 = sadd.s32 %s70, 1
      %p74 = scmp.eq.s32.totalorder %s15, 3
      %p75 = scmp.ne.s32.totalorder %s70, %s72
      %p76 = scmp.eq.s32.totalorder %s15, 0
      %p77 = por %p75, %p76
      %p78 = scmp.ne.s32.totalorder %s70, %s72
      %p79 = scmp.eq.s32.totalorder %s20, 3
      %p80 = por %p78, %p79
      %p81 = scmp.ne.s32.totalorder %s72, %s73
      %p82 = scmp.eq.s32.totalorder %s20, 0
      %p83 = por %p81, %p82
      %p84 = scmp.ne.s32.totalorder %s72, %s73
      %p85 = scmp.eq.s32.totalorder %s21, 3
      %p86 = por %p84, %p85
      %p88 = scmp.ne.s32.totalorder %s73, %s87
      %p89 = scmp.eq.s32.totalorder %s21, 0
      %p90 = por %p88, %p89
      %s92 = sadd.s32 %s91, 1
      %p95 = scmp.eq.s32.totalorder %s15, 3
      %p96 = scmp.ne.s32.totalorder %s91, %s93
      %p97 = scmp.eq.s32.totalorder %s15, 0
      %p98 = por %p96, %p97
      %p99 = scmp.ne.s32.totalorder %s91, %s93
      %p100 = scmp.eq.s32.totalorder %s20, 3
      %p101 = por %p99, %p100
      %p102 = scmp.ne.s32.totalorder %s93, %s94
      %p103 = scmp.eq.s32.totalorder %s20, 0
      %p104 = por %p102, %p103
      %p105 = scmp.ne.s32.totalorder %s93, %s94
      %p106 = scmp.eq.s32.totalorder %s21, 3
      %p107 = por %p105, %p106
      %p109 = scmp.ne.s32.totalorder %s94, %s108
      %p110 = scmp.eq.s32.totalorder %s21, 0
      %p111 = por %p109, %p110
      %s113 = sadd.s32 %s112, 1
      %p116 = scmp.eq.s32.totalorder %s15, 3
      %p117 = scmp.ne.s32.totalorder %s112, %s114
      %p118 = scmp.eq.s32.totalorder %s15, 0
      %p119 = por %p117, %p118
      %p120 = scmp.ne.s32.totalorder %s112, %s114
      %p121 = scmp.eq.s32.totalorder %s20, 3
      %p122 = por %p120, %p121
      %p123 = scmp.ne.s32.totalorder %s114, %s115
      %p124 = scmp.eq.s32.totalorder %s20, 0
      %p125 = por %p123, %p124
      %p126 = scmp.ne.s32.totalorder %s114, %s115
      %p127 = scmp.eq.s32.totalorder %s21, 3
      %p128 = por %p126, %p127
      %p130 = scmp.ne.s32.totalorder %s115, %s129
      %p131 = scmp.eq.s32.totalorder %s21, 0
      %p132 = por %p130, %p131
      %p133 = scmp.le.s32.totalorder 1, %s15
      %p134 = scmp.lt.s32.totalorder %s15, 5
      %p135 = pnand %p133, %p134
      %p136 = pneg %p135
      // Predicated region
      $region9: #{gin_layer.1} parent=5 // pred_check
        _
      $region10: #{gin_layer.1} parent=5 // pred_check_branch
        %138 = sbr.rel (%p135) target = $region12
      $region11: #{gin_layer.1} parent=5 // pred_region
        %s139 = ssub.s32 %s15, 1
        // Predicated region
        $region13: #{gin_layer.1} parent=11 // pred_check
          %p140 = pneg %p62
        $region14: #{gin_layer.1} parent=11 // pred_check_branch
          %142 = sbr.rel (%p140) target = $region16
        $region15: #{gin_layer.1} parent=11 // pred_region
          %s144 = ssub.s32 4096, 4096
          %145 = vsyncadd [#allocation8], %s144
          %s146 = sshll.u32 [#allocation7], 4
          %s147 = int_to_ptr.vmem [resolvable:$true] %s146
          %152 = dma.hbm_to_vmem [thread:$0]  %s1, 4096, %s147, [#allocation8], 64, 64, 4
        $region16: #{gin_layer.1} parent=11 // pred_fallthru
          _
        // Predicated region
        $region17: #{gin_layer.1} parent=11 // pred_check
          %p153 = pneg %p83
        $region18: #{gin_layer.1} parent=11 // pred_check_branch
          %155 = sbr.rel (%p153) target = $region20
        $region19: #{gin_layer.1} parent=11 // pred_region
          %s157 = ssub.s32 2048, 2048
          %158 = vsyncadd [#allocation8], %s157
          %s159 = sshll.u32 [#allocation9], 4
          %s160 = int_to_ptr.vmem [resolvable:$true] %s159
          %165 = dma.hbm_to_vmem [thread:$0]  %s2, 2048, %s160, [#allocation8], 64, 64, 4
        $region20: #{gin_layer.1} parent=11 // pred_fallthru
          _
        // Predicated region
        $region21: #{gin_layer.1} parent=11 // pred_check
          %p166 = pneg %p104
        $region22: #{gin_layer.1} parent=11 // pred_check_branch
          %168 = sbr.rel (%p166) target = $region24
        $region23: #{gin_layer.1} parent=11 // pred_region
          _
        $region24: #{gin_layer.1} parent=11 // pred_fallthru
          _
      $region12: #{gin_layer.1} parent=5 // pred_fallthru
        _
      %p169 = scmp.lt.s32.totalorder %s15, 4
      // Predicated region
      $region25: #{gin_layer.1} parent=5 // pred_check
        %p170 = pneg %p169
      $region26: #{gin_layer.1} parent=5 // pred_check_branch
        %172 = sbr.rel (%p170) target = $region28
      $region27: #{gin_layer.1} parent=5 // pred_region
        // Predicated region
        $region29: #{gin_layer.1} parent=27 // pred_check
          %p173 = pneg %p35
        $region30: #{gin_layer.1} parent=27 // pred_check_branch
          %175 = sbr.rel (%p173) target = $region32
        $region31: #{gin_layer.1} parent=27 // pred_region
          %s176 = sand.u32 %s25, 1
          %s177 = scalar_lea.sflag [#allocation5], %s176
          %s178 = sand.u32 %s25, 1
          %s179 = smul.addr %s178, 256
          %s180 = scalar_lea.vmem [#allocation4], %s179
          %s181 = smul.u32 16, %s15
          %s183 = ssub.s32 4096, 4096
          %184 = vsyncadd %s177, %s183
          %s185 = smul.addr %s181, 4
          %s186 = smul.addr %s185, 64
          %s187 = scalar_lea.hbm %s0, %s186
          %s188 = sshll.u32 %s180, 4
          %s189 = int_to_ptr.vmem [resolvable:$true] %s188
          %194 = dma.hbm_to_vmem [thread:$0]  %s187, 4096, %s189, %s177, 256, 256, 16
        $region32: #{gin_layer.1} parent=27 // pred_fallthru
          _
      $region28: #{gin_layer.1} parent=5 // pred_fallthru
        _
      %p195 = scmp.le.s32.totalorder 1, %s15
      %p196 = scmp.lt.s32.totalorder %s15, 5
      %p197 = pnand %p195, %p196
      %p198 = pneg %p197
      // Predicated region
      $region33: #{gin_layer.1} parent=5 // pred_check
        _
      $region34: #{gin_layer.1} parent=5 // pred_check_branch
        %200 = sbr.rel (%p197) target = $region36
      $region35: #{gin_layer.1} parent=5 // pred_region
        %s201 = ssub.s32 %s15, 1
        %s202 = sand.u32 %s28, 1
        %s203 = scalar_lea.sflag [#allocation5], %s202
        %s204 = sand.u32 %s28, 1
        %s205 = smul.addr %s204, 256
        %s206 = scalar_lea.vmem [#allocation4], %s205
        // Predicated region
        $region37: #{gin_layer.1} parent=35 // pred_check
          %p207 = pneg %p41
        $region38: #{gin_layer.1} parent=35 // pred_check_branch
          %209 = sbr.rel (%p207) target = $region40
        $region39: #{gin_layer.1} parent=35 // pred_region
          %210 = dma.done %s203, 4096
        $region40: #{gin_layer.1} parent=35 // pred_fallthru
          _
        // Predicated region
        $region41: #{gin_layer.1} parent=35 // pred_check
          %p211 = pneg %p62
        $region42: #{gin_layer.1} parent=35 // pred_check_branch
          %213 = sbr.rel (%p211) target = $region44
        $region43: #{gin_layer.1} parent=35 // pred_region
          %214 = dma.done [#allocation8], 4096
        $region44: #{gin_layer.1} parent=35 // pred_fallthru
          _
        // Predicated region
        $region45: #{gin_layer.1} parent=35 // pred_check
          %p215 = pneg %p83
        $region46: #{gin_layer.1} parent=35 // pred_check_branch
          %217 = sbr.rel (%p215) target = $region48
        $region47: #{gin_layer.1} parent=35 // pred_region
          %218 = dma.done [#allocation8], 2048
        $region48: #{gin_layer.1} parent=35 // pred_fallthru
          _
        %s219 = sand.u32 %s28, 1
        %s220 = scalar_lea.sflag [#allocation5], %s219
        %s221 = sand.u32 %s28, 1
        %s222 = smul.addr %s221, 256
        %s223 = scalar_lea.vmem [#allocation4], %s222
        %p224 = pneg %p41
        %p225 = pneg %p38
        %p226 = pneg %p62
        %p227 = pneg %p59
        %p228 = pneg %p83
        %p229 = pneg %p80
        %p230 = pneg %p104
        %p231 = pneg %p101
        %p232 = pneg %p125
        %p233 = pneg %p122
        %s234 = smul.u32 16, %s20
        %p236 = scmp.eq.s32.totalorder %s20, 0
        // Predicated region
        $region49: #{gin_layer.1} parent=35 // pred_check
          %p237 = pneg %p236
        $region50: #{gin_layer.1} parent=35 // pred_check_branch
          %239 = sbr.rel (%p237) target = $region52
        $region51: #{gin_layer.1} parent=35 // pred_region
          %240 = vst [vmem:[#allocation3] sm:$0x3] 0.0
        $region52: #{gin_layer.1} parent=35 // pred_fallthru
          _
        %v241 = vld [vmem:[%s206] sm:$0xff]
        %v242 = vld [vmem:[%s206 + $0x8] sm:$0xff]
        %v243 = vld [vmem:[%s206 + $0x10] sm:$0xff]
        %v244 = vld [vmem:[%s206 + $0x18] sm:$0xff]
        %v245 = vld [vmem:[%s206 + $0x20] sm:$0xff]
        %v246 = vld [vmem:[%s206 + $0x28] sm:$0xff]
        %v247 = vld [vmem:[%s206 + $0x30] sm:$0xff]
        %v248 = vld [vmem:[%s206 + $0x38] sm:$0xff]
        %v249 = vld [vmem:[%s206 + $0x40] sm:$0xff]
        %v250 = vld [vmem:[%s206 + $0x48] sm:$0xff]
        %v251 = vld [vmem:[%s206 + $0x50] sm:$0xff]
        %v252 = vld [vmem:[%s206 + $0x58] sm:$0xff]
        %v253 = vld [vmem:[%s206 + $0x60] sm:$0xff]
        %v254 = vld [vmem:[%s206 + $0x68] sm:$0xff]
        %v255 = vld [vmem:[%s206 + $0x70] sm:$0xff]
        %v256 = vld [vmem:[%s206 + $0x78] sm:$0xff]
        %v257 = vld [vmem:[%s206 + $0x80] sm:$0xff]
        %v258 = vld [vmem:[%s206 + $0x88] sm:$0xff]
        %v259 = vld [vmem:[%s206 + $0x90] sm:$0xff]
        %v260 = vld [vmem:[%s206 + $0x98] sm:$0xff]
        %v261 = vld [vmem:[%s206 + $0xa0] sm:$0xff]
        %v262 = vld [vmem:[%s206 + $0xa8] sm:$0xff]
        %v263 = vld [vmem:[%s206 + $0xb0] sm:$0xff]
        %v264 = vld [vmem:[%s206 + $0xb8] sm:$0xff]
        %v265 = vld [vmem:[%s206 + $0xc0] sm:$0xff]
        %v266 = vld [vmem:[%s206 + $0xc8] sm:$0xff]
        %v267 = vld [vmem:[%s206 + $0xd0] sm:$0xff]
        %v268 = vld [vmem:[%s206 + $0xd8] sm:$0xff]
        %v269 = vld [vmem:[%s206 + $0xe0] sm:$0xff]
        %v270 = vld [vmem:[%s206 + $0xe8] sm:$0xff]
        %v271 = vld [vmem:[%s206 + $0xf0] sm:$0xff]
        %v272 = vld [vmem:[%s206 + $0xf8] sm:$0xff]
        %v273 = vld [vmem:[#allocation7] sm:$0xf]
        %v274 = vld [vmem:[#allocation7 + $0x4] sm:$0xf]
        %v275 = vld [vmem:[#allocation7 + $0x8] sm:$0xf]
        %v276 = vld [vmem:[#allocation7 + $0xc] sm:$0xf]
        %v277 = vld [vmem:[#allocation7 + $0x10] sm:$0xf]
        %v278 = vld [vmem:[#allocation7 + $0x14] sm:$0xf]
        %v279 = vld [vmem:[#allocation7 + $0x18] sm:$0xf]
        %v280 = vld [vmem:[#allocation7 + $0x1c] sm:$0xf]
        %v281 = vld [vmem:[#allocation7 + $0x20] sm:$0xf]
        %v282 = vld [vmem:[#allocation7 + $0x24] sm:$0xf]
        %v283 = vld [vmem:[#allocation7 + $0x28] sm:$0xf]
        %v284 = vld [vmem:[#allocation7 + $0x2c] sm:$0xf]
        %v285 = vld [vmem:[#allocation7 + $0x30] sm:$0xf]
        %v286 = vld [vmem:[#allocation7 + $0x34] sm:$0xf]
        %v287 = vld [vmem:[#allocation7 + $0x38] sm:$0xf]
        %v288 = vld [vmem:[#allocation7 + $0x3c] sm:$0xf]
        %v289 = vld [vmem:[#allocation7 + $0x40] sm:$0xf]
        %v290 = vld [vmem:[#allocation7 + $0x44] sm:$0xf]
        %v291 = vld [vmem:[#allocation7 + $0x48] sm:$0xf]
        %v292 = vld [vmem:[#allocation7 + $0x4c] sm:$0xf]
        %v293 = vld [vmem:[#allocation7 + $0x50] sm:$0xf]
        %v294 = vld [vmem:[#allocation7 + $0x54] sm:$0xf]
        %v295 = vld [vmem:[#allocation7 + $0x58] sm:$0xf]
        %v296 = vld [vmem:[#allocation7 + $0x5c] sm:$0xf]
        %v297 = vld [vmem:[#allocation7 + $0x60] sm:$0xf]
        %v298 = vld [vmem:[#allocation7 + $0x64] sm:$0xf]
        %v299 = vld [vmem:[#allocation7 + $0x68] sm:$0xf]
        %v300 = vld [vmem:[#allocation7 + $0x6c] sm:$0xf]
        %v301 = vld [vmem:[#allocation7 + $0x70] sm:$0xf]
        %v302 = vld [vmem:[#allocation7 + $0x74] sm:$0xf]
        %v303 = vld [vmem:[#allocation7 + $0x78] sm:$0xf]
        %v304 = vld [vmem:[#allocation7 + $0x7c] sm:$0xf]
        %v305 = vld [vmem:[#allocation7 + $0x80] sm:$0xf]
        %v306 = vld [vmem:[#allocation7 + $0x84] sm:$0xf]
        %v307 = vld [vmem:[#allocation7 + $0x88] sm:$0xf]
        %v308 = vld [vmem:[#allocation7 + $0x8c] sm:$0xf]
        %v309 = vld [vmem:[#allocation7 + $0x90] sm:$0xf]
        %v310 = vld [vmem:[#allocation7 + $0x94] sm:$0xf]
        %v311 = vld [vmem:[#allocation7 + $0x98] sm:$0xf]
        %v312 = vld [vmem:[#allocation7 + $0x9c] sm:$0xf]
        %v313 = vld [vmem:[#allocation7 + $0xa0] sm:$0xf]
        %v314 = vld [vmem:[#allocation7 + $0xa4] sm:$0xf]
        %v315 = vld [vmem:[#allocation7 + $0xa8] sm:$0xf]
        %v316 = vld [vmem:[#allocation7 + $0xac] sm:$0xf]
        %v317 = vld [vmem:[#allocation7 + $0xb0] sm:$0xf]
        %v318 = vld [vmem:[#allocation7 + $0xb4] sm:$0xf]
        %v319 = vld [vmem:[#allocation7 + $0xb8] sm:$0xf]
        %v320 = vld [vmem:[#allocation7 + $0xbc] sm:$0xf]
        %v321 = vld [vmem:[#allocation7 + $0xc0] sm:$0xf]
        %v322 = vld [vmem:[#allocation7 + $0xc4] sm:$0xf]
        %v323 = vld [vmem:[#allocation7 + $0xc8] sm:$0xf]
        %v324 = vld [vmem:[#allocation7 + $0xcc] sm:$0xf]
        %v325 = vld [vmem:[#allocation7 + $0xd0] sm:$0xf]
        %v326 = vld [vmem:[#allocation7 + $0xd4] sm:$0xf]
        %v327 = vld [vmem:[#allocation7 + $0xd8] sm:$0xf]
        %v328 = vld [vmem:[#allocation7 + $0xdc] sm:$0xf]
        %v329 = vld [vmem:[#allocation7 + $0xe0] sm:$0xf]
        %v330 = vld [vmem:[#allocation7 + $0xe4] sm:$0xf]
        %v331 = vld [vmem:[#allocation7 + $0xe8] sm:$0xf]
        %v332 = vld [vmem:[#allocation7 + $0xec] sm:$0xf]
        %v333 = vld [vmem:[#allocation7 + $0xf0] sm:$0xf]
        %v334 = vld [vmem:[#allocation7 + $0xf4] sm:$0xf]
        %v335 = vld [vmem:[#allocation7 + $0xf8] sm:$0xf]
        %v336 = vld [vmem:[#allocation7 + $0xfc] sm:$0xf]
        %v369 = vunpack.c.l.b16 %v241
        %v370 = vunpack.c.h.b16 %v241
        %v371 = vunpack.c.l.b16 %v242
        %v372 = vunpack.c.h.b16 %v242
        %v373 = vunpack.c.l.b16 %v243
        %v374 = vunpack.c.h.b16 %v243
        %v375 = vunpack.c.l.b16 %v244
        %v376 = vunpack.c.h.b16 %v244
        %v377 = vunpack.c.l.b16 %v245
        %v378 = vunpack.c.h.b16 %v245
        %v379 = vunpack.c.l.b16 %v246
        %v380 = vunpack.c.h.b16 %v246
        %v381 = vunpack.c.l.b16 %v247
        %v382 = vunpack.c.h.b16 %v247
        %v383 = vunpack.c.l.b16 %v248
        %v384 = vunpack.c.h.b16 %v248
        %v385 = vunpack.c.l.b16 %v249
        %v386 = vunpack.c.h.b16 %v249
        %v387 = vunpack.c.l.b16 %v250
        %v388 = vunpack.c.h.b16 %v250
        %v389 = vunpack.c.l.b16 %v251
        %v390 = vunpack.c.h.b16 %v251
        %v391 = vunpack.c.l.b16 %v252
        %v392 = vunpack.c.h.b16 %v252
        %v393 = vunpack.c.l.b16 %v253
        %v394 = vunpack.c.h.b16 %v253
        %v395 = vunpack.c.l.b16 %v254
        %v396 = vunpack.c.h.b16 %v254
        %v397 = vunpack.c.l.b16 %v255
        %v398 = vunpack.c.h.b16 %v255
        %v399 = vunpack.c.l.b16 %v256
        %v400 = vunpack.c.h.b16 %v256
        %v401 = vunpack.c.l.b16 %v257
        %v402 = vunpack.c.h.b16 %v257
        %v403 = vunpack.c.l.b16 %v258
        %v404 = vunpack.c.h.b16 %v258
        %v405 = vunpack.c.l.b16 %v259
        %v406 = vunpack.c.h.b16 %v259
        %v407 = vunpack.c.l.b16 %v260
        %v408 = vunpack.c.h.b16 %v260
        %v409 = vunpack.c.l.b16 %v261
        %v410 = vunpack.c.h.b16 %v261
        %v411 = vunpack.c.l.b16 %v262
        %v412 = vunpack.c.h.b16 %v262
        %v413 = vunpack.c.l.b16 %v263
        %v414 = vunpack.c.h.b16 %v263
        %v415 = vunpack.c.l.b16 %v264
        %v416 = vunpack.c.h.b16 %v264
        %v417 = vunpack.c.l.b16 %v265
        %v418 = vunpack.c.h.b16 %v265
        %v419 = vunpack.c.l.b16 %v266
        %v420 = vunpack.c.h.b16 %v266
        %v421 = vunpack.c.l.b16 %v267
        %v422 = vunpack.c.h.b16 %v267
        %v423 = vunpack.c.l.b16 %v268
        %v424 = vunpack.c.h.b16 %v268
        %v425 = vunpack.c.l.b16 %v269
        %v426 = vunpack.c.h.b16 %v269
        %v427 = vunpack.c.l.b16 %v270
        %v428 = vunpack.c.h.b16 %v270
        %v429 = vunpack.c.l.b16 %v271
        %v430 = vunpack.c.h.b16 %v271
        %v431 = vunpack.c.l.b16 %v272
        %v432 = vunpack.c.h.b16 %v272
        %v433 = vpack.c.b16 %v373, %v369
        %v434 = vpack.c.b16 %v374, %v370
        %v435 = vpack.c.b16 %v375, %v371
        %v436 = vpack.c.b16 %v376, %v372
        %v437 = vpack.c.b16 %v381, %v377
        %v438 = vpack.c.b16 %v382, %v378
        %v439 = vpack.c.b16 %v383, %v379
        %v440 = vpack.c.b16 %v384, %v380
        %v441 = vpack.c.b16 %v389, %v385
        %v442 = vpack.c.b16 %v390, %v386
        %v443 = vpack.c.b16 %v391, %v387
        %v444 = vpack.c.b16 %v392, %v388
        %v445 = vpack.c.b16 %v397, %v393
        %v446 = vpack.c.b16 %v398, %v394
        %v447 = vpack.c.b16 %v399, %v395
        %v448 = vpack.c.b16 %v400, %v396
        %v449 = vpack.c.b16 %v405, %v401
        %v450 = vpack.c.b16 %v406, %v402
        %v451 = vpack.c.b16 %v407, %v403
        %v452 = vpack.c.b16 %v408, %v404
        %v453 = vpack.c.b16 %v413, %v409
        %v454 = vpack.c.b16 %v414, %v410
        %v455 = vpack.c.b16 %v415, %v411
        %v456 = vpack.c.b16 %v416, %v412
        %v457 = vpack.c.b16 %v421, %v417
        %v458 = vpack.c.b16 %v422, %v418
        %v459 = vpack.c.b16 %v423, %v419
        %v460 = vpack.c.b16 %v424, %v420
        %v461 = vpack.c.b16 %v429, %v425
        %v462 = vpack.c.b16 %v430, %v426
        %v463 = vpack.c.b16 %v431, %v427
        %v464 = vpack.c.b16 %v432, %v428
        %v561 = vunpack.c.l.b16 %v273
        %v562 = vunpack.c.l.b16 %v274
        %v563 = vunpack.c.l.b16 %v275
        %v564 = vunpack.c.l.b16 %v276
        %v565 = vunpack.c.l.b16 %v277
        %v566 = vunpack.c.l.b16 %v278
        %v567 = vunpack.c.l.b16 %v279
        %v568 = vunpack.c.l.b16 %v280
        %v569 = vunpack.c.l.b16 %v281
        %v570 = vunpack.c.l.b16 %v282
        %v571 = vunpack.c.l.b16 %v283
        %v572 = vunpack.c.l.b16 %v284
        %v573 = vunpack.c.l.b16 %v285
        %v574 = vunpack.c.l.b16 %v286
        %v575 = vunpack.c.l.b16 %v287
        %v576 = vunpack.c.l.b16 %v288
        %v577 = vunpack.c.l.b16 %v289
        %v578 = vunpack.c.l.b16 %v290
        %v579 = vunpack.c.l.b16 %v291
        %v580 = vunpack.c.l.b16 %v292
        %v581 = vunpack.c.l.b16 %v293
        %v582 = vunpack.c.l.b16 %v294
        %v583 = vunpack.c.l.b16 %v295
        %v584 = vunpack.c.l.b16 %v296
        %v585 = vunpack.c.l.b16 %v297
        %v586 = vunpack.c.l.b16 %v298
        %v587 = vunpack.c.l.b16 %v299
        %v588 = vunpack.c.l.b16 %v300
        %v589 = vunpack.c.l.b16 %v301
        %v590 = vunpack.c.l.b16 %v302
        %v591 = vunpack.c.l.b16 %v303
        %v592 = vunpack.c.l.b16 %v304
        %v593 = vunpack.c.l.b16 %v305
        %v594 = vunpack.c.l.b16 %v306
        %v595 = vunpack.c.l.b16 %v307
        %v596 = vunpack.c.l.b16 %v308
        %v597 = vunpack.c.l.b16 %v309
        %v598 = vunpack.c.l.b16 %v310
        %v599 = vunpack.c.l.b16 %v311
        %v600 = vunpack.c.l.b16 %v312
        %v601 = vunpack.c.l.b16 %v313
        %v602 = vunpack.c.l.b16 %v314
        %v603 = vunpack.c.l.b16 %v315
        %v604 = vunpack.c.l.b16 %v316
        %v605 = vunpack.c.l.b16 %v317
        %v606 = vunpack.c.l.b16 %v318
        %v607 = vunpack.c.l.b16 %v319
        %v608 = vunpack.c.l.b16 %v320
        %v609 = vunpack.c.l.b16 %v321
        %v610 = vunpack.c.l.b16 %v322
        %v611 = vunpack.c.l.b16 %v323
        %v612 = vunpack.c.l.b16 %v324
        %v613 = vunpack.c.l.b16 %v325
        %v614 = vunpack.c.l.b16 %v326
        %v615 = vunpack.c.l.b16 %v327
        %v616 = vunpack.c.l.b16 %v328
        %v617 = vunpack.c.l.b16 %v329
        %v618 = vunpack.c.l.b16 %v330
        %v619 = vunpack.c.l.b16 %v331
        %v620 = vunpack.c.l.b16 %v332
        %v621 = vunpack.c.l.b16 %v333
        %v622 = vunpack.c.l.b16 %v334
        %v623 = vunpack.c.l.b16 %v335
        %v624 = vunpack.c.l.b16 %v336
        %v625 = vpack.c.b16 %v562, %v561
        %v626 = vpack.c.b16 %v564, %v563
        %v627 = vpack.c.b16 %v566, %v565
        %v628 = vpack.c.b16 %v568, %v567
        %v629 = vpack.c.b16 %v570, %v569
        %v630 = vpack.c.b16 %v572, %v571
        %v631 = vpack.c.b16 %v574, %v573
        %v632 = vpack.c.b16 %v576, %v575
        %v633 = vpack.c.b16 %v578, %v577
        %v634 = vpack.c.b16 %v580, %v579
        %v635 = vpack.c.b16 %v582, %v581
        %v636 = vpack.c.b16 %v584, %v583
        %v637 = vpack.c.b16 %v586, %v585
        %v638 = vpack.c.b16 %v588, %v587
        %v639 = vpack.c.b16 %v590, %v589
        %v640 = vpack.c.b16 %v592, %v591
        %v641 = vpack.c.b16 %v594, %v593
        %v642 = vpack.c.b16 %v596, %v595
        %v643 = vpack.c.b16 %v598, %v597
        %v644 = vpack.c.b16 %v600, %v599
        %v645 = vpack.c.b16 %v602, %v601
        %v646 = vpack.c.b16 %v604, %v603
        %v647 = vpack.c.b16 %v606, %v605
        %v648 = vpack.c.b16 %v608, %v607
        %v649 = vpack.c.b16 %v610, %v609
        %v650 = vpack.c.b16 %v612, %v611
        %v651 = vpack.c.b16 %v614, %v613
        %v652 = vpack.c.b16 %v616, %v615
        %v653 = vpack.c.b16 %v618, %v617
        %v654 = vpack.c.b16 %v620, %v619
        %v655 = vpack.c.b16 %v622, %v621
        %v656 = vpack.c.b16 %v624, %v623
        %689 = vmatprep.subr.bf16.mxu0 0
        %690 = vmatpush1.bf16.msra.mxu0 %v632
        %691 = vmatprep.subr.bf16.mxu0 0
        %692 = vmatpush1.bf16.msra.mxu0 %v631
        %693 = vmatprep.subr.bf16.mxu0 0
        %694 = vmatpush1.bf16.msra.mxu0 %v630
        %695 = vmatprep.subr.bf16.mxu0 0
        %696 = vmatpush1.bf16.msra.mxu0 %v629
        %697 = vmatprep.subr.bf16.mxu0 0
        %698 = vmatpush1.bf16.msra.mxu0 %v628
        %699 = vmatprep.subr.bf16.mxu0 0
        %700 = vmatpush1.bf16.msra.mxu0 %v627
        %701 = vmatprep.subr.bf16.mxu0 0
        %702 = vmatpush1.bf16.msra.mxu0 %v626
        %703 = vmatprep.subr.bf16.mxu0 0
        %704 = vmatpush1.bf16.msra.mxu0 %v625
        %705 = vmatprep.subr.bf16.mxu0 0
        %706 = vmatpush2.bf16.msra.mxu0 %v640
        %707 = vmatprep.subr.bf16.mxu0 0
        %708 = vmatpush2.bf16.msra.mxu0 %v639
        %709 = vmatprep.subr.bf16.mxu0 0
        %710 = vmatpush2.bf16.msra.mxu0 %v638
        %711 = vmatprep.subr.bf16.mxu0 0
        %712 = vmatpush2.bf16.msra.mxu0 %v637
        %713 = vmatprep.subr.bf16.mxu0 0
        %714 = vmatpush2.bf16.msra.mxu0 %v636
        %715 = vmatprep.subr.bf16.mxu0 0
        %716 = vmatpush2.bf16.msra.mxu0 %v635
        %717 = vmatprep.subr.bf16.mxu0 0
        %718 = vmatpush2.bf16.msra.mxu0 %v634
        %719 = vmatprep.subr.bf16.mxu0 0
        %720 = vmatpush2.bf16.msra.mxu0 %v633
        %721 = vmatprep.mubr.bf16.mxu0 %v434
        %722 = vmatmul.mubr.bf16.gmra.mxu0 %v433
        %v723 = vpop.f32.mrf.mxu0
        %v724 = vadd.f32 0.0, %v723
        %v725 = vpop.f32.mrf.mxu0
        %v726 = vpop.f32.mrf.mxu0
        %v727 = vadd.f32 0.0, %v726
        %v728 = vpop.f32.mrf.mxu0
        %729 = vmatprep.mubr.bf16.mxu0 %v438
        %730 = vmatmul.mubr.bf16.gmra.mxu0 %v437
        %v731 = vpop.f32.mrf.mxu0
        %v732 = vadd.f32 0.0, %v731
        %v733 = vpop.f32.mrf.mxu0
        %v734 = vpop.f32.mrf.mxu0
        %v735 = vadd.f32 0.0, %v734
        %v736 = vpop.f32.mrf.mxu0
        %737 = vmatprep.mubr.bf16.mxu0 %v442
        %738 = vmatmul.mubr.bf16.gmra.mxu0 %v441
        %v739 = vpop.f32.mrf.mxu0
        %v740 = vadd.f32 0.0, %v739
        %v741 = vpop.f32.mrf.mxu0
        %v742 = vpop.f32.mrf.mxu0
        %v743 = vadd.f32 0.0, %v742
        %v744 = vpop.f32.mrf.mxu0
        %745 = vmatprep.mubr.bf16.mxu0 %v446
        %746 = vmatmul.mubr.bf16.gmra.mxu0 %v445
        %v747 = vpop.f32.mrf.mxu0
        %v748 = vadd.f32 0.0, %v747
        %v749 = vpop.f32.mrf.mxu0
        %v750 = vpop.f32.mrf.mxu0
        %v751 = vadd.f32 0.0, %v750
        %v752 = vpop.f32.mrf.mxu0
        %753 = vmatprep.mubr.bf16.mxu0 %v450
        %754 = vmatmul.mubr.bf16.gmra.mxu0 %v449
        %v755 = vpop.f32.mrf.mxu0
        %v756 = vadd.f32 0.0, %v755
        %v757 = vpop.f32.mrf.mxu0
        %v758 = vpop.f32.mrf.mxu0
        %v759 = vadd.f32 0.0, %v758
        %v760 = vpop.f32.mrf.mxu0
        %761 = vmatprep.mubr.bf16.mxu0 %v454
        %762 = vmatmul.mubr.bf16.gmra.mxu0 %v453
        %v763 = vpop.f32.mrf.mxu0
        %v764 = vadd.f32 0.0, %v763
        %v765 = vpop.f32.mrf.mxu0
        %v766 = vpop.f32.mrf.mxu0
        %v767 = vadd.f32 0.0, %v766
        %v768 = vpop.f32.mrf.mxu0
        %769 = vmatprep.mubr.bf16.mxu0 %v458
        %770 = vmatmul.mubr.bf16.gmra.mxu0 %v457
        %v771 = vpop.f32.mrf.mxu0
        %v772 = vadd.f32 0.0, %v771
        %v773 = vpop.f32.mrf.mxu0
        %v774 = vpop.f32.mrf.mxu0
        %v775 = vadd.f32 0.0, %v774
        %v776 = vpop.f32.mrf.mxu0
        %777 = vmatprep.mubr.bf16.mxu0 %v462
        %778 = vmatmul.mubr.bf16.gmra.mxu0 %v461
        %v779 = vpop.f32.mrf.mxu0
        %v780 = vadd.f32 0.0, %v779
        %v781 = vpop.f32.mrf.mxu0
        %v782 = vpop.f32.mrf.mxu0
        %v783 = vadd.f32 0.0, %v782
        %v784 = vpop.f32.mrf.mxu0
        %785 = vdwg.mxu0
        %786 = vmatprep.subr.bf16.mxu0 0
        %787 = vmatpush1.bf16.msra.mxu0 %v648
        %788 = vmatprep.subr.bf16.mxu0 0
        %789 = vmatpush1.bf16.msra.mxu0 %v647
        %790 = vmatprep.subr.bf16.mxu0 0
        %791 = vmatpush1.bf16.msra.mxu0 %v646
        %792 = vmatprep.subr.bf16.mxu0 0
        %793 = vmatpush1.bf16.msra.mxu0 %v645
        %794 = vmatprep.subr.bf16.mxu0 0
        %795 = vmatpush1.bf16.msra.mxu0 %v644
        %796 = vmatprep.subr.bf16.mxu0 0
        %797 = vmatpush1.bf16.msra.mxu0 %v643
        %798 = vmatprep.subr.bf16.mxu0 0
        %799 = vmatpush1.bf16.msra.mxu0 %v642
        %800 = vmatprep.subr.bf16.mxu0 0
        %801 = vmatpush1.bf16.msra.mxu0 %v641
        %802 = vmatprep.subr.bf16.mxu0 0
        %803 = vmatpush2.bf16.msra.mxu0 %v656
        %804 = vmatprep.subr.bf16.mxu0 0
        %805 = vmatpush2.bf16.msra.mxu0 %v655
        %806 = vmatprep.subr.bf16.mxu0 0
        %807 = vmatpush2.bf16.msra.mxu0 %v654
        %808 = vmatprep.subr.bf16.mxu0 0
        %809 = vmatpush2.bf16.msra.mxu0 %v653
        %810 = vmatprep.subr.bf16.mxu0 0
        %811 = vmatpush2.bf16.msra.mxu0 %v652
        %812 = vmatprep.subr.bf16.mxu0 0
        %813 = vmatpush2.bf16.msra.mxu0 %v651
        %814 = vmatprep.subr.bf16.mxu0 0
        %815 = vmatpush2.bf16.msra.mxu0 %v650
        %816 = vmatprep.subr.bf16.mxu0 0
        %817 = vmatpush2.bf16.msra.mxu0 %v649
        %818 = vmatprep.mubr.bf16.mxu0 %v436
        %819 = vmatmul.mubr.bf16.gmra.mxu0 %v435
        %v820 = vpop.f32.mrf.mxu0
        %v821 = vadd.f32 %v724, %v820
        %v822 = vpop.f32.mrf.mxu0
        %v823 = vpop.f32.mrf.mxu0
        %v824 = vadd.f32 %v727, %v823
        %v825 = vpop.f32.mrf.mxu0
        %826 = vmatprep.mubr.bf16.mxu0 %v440
        %827 = vmatmul.mubr.bf16.gmra.mxu0 %v439
        %v828 = vpop.f32.mrf.mxu0
        %v829 = vadd.f32 %v732, %v828
        %v830 = vpop.f32.mrf.mxu0
        %v831 = vpop.f32.mrf.mxu0
        %v832 = vadd.f32 %v735, %v831
        %v833 = vpop.f32.mrf.mxu0
        %834 = vmatprep.mubr.bf16.mxu0 %v444
        %835 = vmatmul.mubr.bf16.gmra.mxu0 %v443
        %v836 = vpop.f32.mrf.mxu0
        %v837 = vadd.f32 %v740, %v836
        %v838 = vpop.f32.mrf.mxu0
        %v839 = vpop.f32.mrf.mxu0
        %v840 = vadd.f32 %v743, %v839
        %v841 = vpop.f32.mrf.mxu0
        %842 = vmatprep.mubr.bf16.mxu0 %v448
        %843 = vmatmul.mubr.bf16.gmra.mxu0 %v447
        %v844 = vpop.f32.mrf.mxu0
        %v845 = vadd.f32 %v748, %v844
        %v846 = vpop.f32.mrf.mxu0
        %v847 = vpop.f32.mrf.mxu0
        %v848 = vadd.f32 %v751, %v847
        %v849 = vpop.f32.mrf.mxu0
        %850 = vmatprep.mubr.bf16.mxu0 %v452
        %851 = vmatmul.mubr.bf16.gmra.mxu0 %v451
        %v852 = vpop.f32.mrf.mxu0
        %v853 = vadd.f32 %v756, %v852
        %v854 = vpop.f32.mrf.mxu0
        %v855 = vpop.f32.mrf.mxu0
        %v856 = vadd.f32 %v759, %v855
        %v857 = vpop.f32.mrf.mxu0
        %858 = vmatprep.mubr.bf16.mxu0 %v456
        %859 = vmatmul.mubr.bf16.gmra.mxu0 %v455
        %v860 = vpop.f32.mrf.mxu0
        %v861 = vadd.f32 %v764, %v860
        %v862 = vpop.f32.mrf.mxu0
        %v863 = vpop.f32.mrf.mxu0
        %v864 = vadd.f32 %v767, %v863
        %v865 = vpop.f32.mrf.mxu0
        %866 = vmatprep.mubr.bf16.mxu0 %v460
        %867 = vmatmul.mubr.bf16.gmra.mxu0 %v459
        %v868 = vpop.f32.mrf.mxu0
        %v869 = vadd.f32 %v772, %v868
        %v870 = vpop.f32.mrf.mxu0
        %v871 = vpop.f32.mrf.mxu0
        %v872 = vadd.f32 %v775, %v871
        %v873 = vpop.f32.mrf.mxu0
        %874 = vmatprep.mubr.bf16.mxu0 %v464
        %875 = vmatmul.mubr.bf16.gmra.mxu0 %v463
        %v876 = vpop.f32.mrf.mxu0
        %v877 = vadd.f32 %v780, %v876
        %v878 = vpop.f32.mrf.mxu0
        %v879 = vpop.f32.mrf.mxu0
        %v880 = vadd.f32 %v783, %v879
        %v881 = vpop.f32.mrf.mxu0
        %882 = vdwg.mxu0
        %v883 = vpack.c.bf16 %v824, %v821
        %v884 = vpack.c.bf16 %v832, %v829
        %v885 = vpack.c.bf16 %v840, %v837
        %v886 = vpack.c.bf16 %v848, %v845
        %v887 = vpack.c.bf16 %v856, %v853
        %v888 = vpack.c.bf16 %v864, %v861
        %v889 = vpack.c.bf16 %v872, %v869
        %v890 = vpack.c.bf16 %v880, %v877
        %v891 = vld [vmem:[#allocation9] sm:$0xf]
        %v892 = vld [vmem:[#allocation9 + $0x4] sm:$0xf]
        %v893 = vld [vmem:[#allocation9 + $0x8] sm:$0xf]
        %v894 = vld [vmem:[#allocation9 + $0xc] sm:$0xf]
        %v895 = vld [vmem:[#allocation9 + $0x10] sm:$0xf]
        %v896 = vld [vmem:[#allocation9 + $0x14] sm:$0xf]
        %v897 = vld [vmem:[#allocation9 + $0x18] sm:$0xf]
        %v898 = vld [vmem:[#allocation9 + $0x1c] sm:$0xf]
        %v899 = vld [vmem:[#allocation9 + $0x20] sm:$0xf]
        %v900 = vld [vmem:[#allocation9 + $0x24] sm:$0xf]
        %v901 = vld [vmem:[#allocation9 + $0x28] sm:$0xf]
        %v902 = vld [vmem:[#allocation9 + $0x2c] sm:$0xf]
        %v903 = vld [vmem:[#allocation9 + $0x30] sm:$0xf]
        %v904 = vld [vmem:[#allocation9 + $0x34] sm:$0xf]
        %v905 = vld [vmem:[#allocation9 + $0x38] sm:$0xf]
        %v906 = vld [vmem:[#allocation9 + $0x3c] sm:$0xf]
        %v923 = vunpack.c.l.b16 %v891
        %v924 = vunpack.c.l.b16 %v892
        %v925 = vunpack.c.l.b16 %v893
        %v926 = vunpack.c.l.b16 %v894
        %v927 = vunpack.c.l.b16 %v895
        %v928 = vunpack.c.l.b16 %v896
        %v929 = vunpack.c.l.b16 %v897
        %v930 = vunpack.c.l.b16 %v898
        %v931 = vunpack.c.l.b16 %v899
        %v932 = vunpack.c.l.b16 %v900
        %v933 = vunpack.c.l.b16 %v901
        %v934 = vunpack.c.l.b16 %v902
        %v935 = vunpack.c.l.b16 %v903
        %v936 = vunpack.c.l.b16 %v904
        %v937 = vunpack.c.l.b16 %v905
        %v938 = vunpack.c.l.b16 %v906
        %v939 = vpack.c.b16 %v924, %v923
        %v940 = vpack.c.b16 %v926, %v925
        %v941 = vpack.c.b16 %v928, %v927
        %v942 = vpack.c.b16 %v930, %v929
        %v943 = vpack.c.b16 %v932, %v931
        %v944 = vpack.c.b16 %v934, %v933
        %v945 = vpack.c.b16 %v936, %v935
        %v946 = vpack.c.b16 %v938, %v937
        %955 = vmatprep.subr.bf16.mxu0 0
        %956 = vmatpush1.bf16.msra.mxu0 %v946
        %957 = vmatprep.subr.bf16.mxu0 0
        %958 = vmatpush1.bf16.msra.mxu0 %v945
        %959 = vmatprep.subr.bf16.mxu0 0
        %960 = vmatpush1.bf16.msra.mxu0 %v944
        %961 = vmatprep.subr.bf16.mxu0 0
        %962 = vmatpush1.bf16.msra.mxu0 %v943
        %963 = vmatprep.subr.bf16.mxu0 0
        %964 = vmatpush1.bf16.msra.mxu0 %v942
        %965 = vmatprep.subr.bf16.mxu0 0
        %966 = vmatpush1.bf16.msra.mxu0 %v941
        %967 = vmatprep.subr.bf16.mxu0 0
        %968 = vmatpush1.bf16.msra.mxu0 %v940
        %969 = vmatprep.subr.bf16.mxu0 0
        %970 = vmatpush1.bf16.msra.mxu0 %v939
        %971 = vmatprep.subr.bf16.mxu0 0
        %972 = vmatpush2.bf16.msra.mxu0 0
        %973 = vmatprep.subr.bf16.mxu0 0
        %974 = vmatpush2.bf16.msra.mxu0 0
        %975 = vmatprep.subr.bf16.mxu0 0
        %976 = vmatpush2.bf16.msra.mxu0 0
        %977 = vmatprep.subr.bf16.mxu0 0
        %978 = vmatpush2.bf16.msra.mxu0 0
        %979 = vmatprep.subr.bf16.mxu0 0
        %980 = vmatpush2.bf16.msra.mxu0 0
        %981 = vmatprep.subr.bf16.mxu0 0
        %982 = vmatpush2.bf16.msra.mxu0 0
        %983 = vmatprep.subr.bf16.mxu0 0
        %984 = vmatpush2.bf16.msra.mxu0 0
        %985 = vmatprep.subr.bf16.mxu0 0
        %986 = vmatpush2.bf16.msra.mxu0 0
        %987 = vmatprep.mubr.bf16.mxu0 0
        %988 = vmatmul.mubr.bf16.gmra.mxu0 %v883
        %v989 = vpop.f32.mrf.mxu0
        %v990 = vadd.f32 0.0, %v989
        %v991 = vpop.f32.mrf.mxu0
        %v992 = vpop.f32.mrf.mxu0
        %v993 = vadd.f32 0.0, %v992
        %v994 = vpop.f32.mrf.mxu0
        %995 = vmatprep.mubr.bf16.mxu0 0
        %996 = vmatmul.mubr.bf16.gmra.mxu0 %v884
        %v997 = vpop.f32.mrf.mxu0
        %v998 = vadd.f32 0.0, %v997
        %v999 = vpop.f32.mrf.mxu0
        %v1000 = vpop.f32.mrf.mxu0
        %v1001 = vadd.f32 0.0, %v1000
        %v1002 = vpop.f32.mrf.mxu0
        %1003 = vmatprep.mubr.bf16.mxu0 0
        %1004 = vmatmul.mubr.bf16.gmra.mxu0 %v885
        %v1005 = vpop.f32.mrf.mxu0
        %v1006 = vadd.f32 0.0, %v1005
        %v1007 = vpop.f32.mrf.mxu0
        %v1008 = vpop.f32.mrf.mxu0
        %v1009 = vadd.f32 0.0, %v1008
        %v1010 = vpop.f32.mrf.mxu0
        %1011 = vmatprep.mubr.bf16.mxu0 0
        %1012 = vmatmul.mubr.bf16.gmra.mxu0 %v886
        %v1013 = vpop.f32.mrf.mxu0
        %v1014 = vadd.f32 0.0, %v1013
        %v1015 = vpop.f32.mrf.mxu0
        %v1016 = vpop.f32.mrf.mxu0
        %v1017 = vadd.f32 0.0, %v1016
        %v1018 = vpop.f32.mrf.mxu0
        %1019 = vmatprep.mubr.bf16.mxu0 0
        %1020 = vmatmul.mubr.bf16.gmra.mxu0 %v887
        %v1021 = vpop.f32.mrf.mxu0
        %v1022 = vadd.f32 0.0, %v1021
        %v1023 = vpop.f32.mrf.mxu0
        %v1024 = vpop.f32.mrf.mxu0
        %v1025 = vadd.f32 0.0, %v1024
        %v1026 = vpop.f32.mrf.mxu0
        %1027 = vmatprep.mubr.bf16.mxu0 0
        %1028 = vmatmul.mubr.bf16.gmra.mxu0 %v888
        %v1029 = vpop.f32.mrf.mxu0
        %v1030 = vadd.f32 0.0, %v1029
        %v1031 = vpop.f32.mrf.mxu0
        %v1032 = vpop.f32.mrf.mxu0
        %v1033 = vadd.f32 0.0, %v1032
        %v1034 = vpop.f32.mrf.mxu0
        %1035 = vmatprep.mubr.bf16.mxu0 0
        %1036 = vmatmul.mubr.bf16.gmra.mxu0 %v889
        %v1037 = vpop.f32.mrf.mxu0
        %v1038 = vadd.f32 0.0, %v1037
        %v1039 = vpop.f32.mrf.mxu0
        %v1040 = vpop.f32.mrf.mxu0
        %v1041 = vadd.f32 0.0, %v1040
        %v1042 = vpop.f32.mrf.mxu0
        %1043 = vmatprep.mubr.bf16.mxu0 0
        %1044 = vmatmul.mubr.bf16.gmra.mxu0 %v890
        %v1045 = vpop.f32.mrf.mxu0
        %v1046 = vadd.f32 0.0, %v1045
        %v1047 = vpop.f32.mrf.mxu0
        %v1048 = vpop.f32.mrf.mxu0
        %v1049 = vadd.f32 0.0, %v1048
        %v1050 = vpop.f32.mrf.mxu0
        %1051 = vdwg.mxu0
        %s1052 = smul.u32 %s20, 128
        %s1053 = scalar_lea.vmem [#allocation2], %s1052
        %1054 = vst [vmem:[%s1053] sm:$0xff] %v990
        %1055 = vst [vmem:[%s1053 + $0x8] sm:$0xff] %v993
        %1056 = vst [vmem:[%s1053 + $0x10] sm:$0xff] %v998
        %1057 = vst [vmem:[%s1053 + $0x18] sm:$0xff] %v1001
        %1058 = vst [vmem:[%s1053 + $0x20] sm:$0xff] %v1006
        %1059 = vst [vmem:[%s1053 + $0x28] sm:$0xff] %v1009
        %1060 = vst [vmem:[%s1053 + $0x30] sm:$0xff] %v1014
        %1061 = vst [vmem:[%s1053 + $0x38] sm:$0xff] %v1017
        %1062 = vst [vmem:[%s1053 + $0x40] sm:$0xff] %v1022
        %1063 = vst [vmem:[%s1053 + $0x48] sm:$0xff] %v1025
        %1064 = vst [vmem:[%s1053 + $0x50] sm:$0xff] %v1030
        %1065 = vst [vmem:[%s1053 + $0x58] sm:$0xff] %v1033
        %1066 = vst [vmem:[%s1053 + $0x60] sm:$0xff] %v1038
        %1067 = vst [vmem:[%s1053 + $0x68] sm:$0xff] %v1041
        %1068 = vst [vmem:[%s1053 + $0x70] sm:$0xff] %v1046
        %1069 = vst [vmem:[%s1053 + $0x78] sm:$0xff] %v1049
        %v1070 = vld [vmem:[#allocation3] sm:$0x1]
        %v1071 = vadd.f32 %v990, %v993
        %v1072 = vadd.f32 %v1071, %v998
        %v1073 = vadd.f32 %v1072, %v1001
        %v1074 = vadd.f32 %v1073, %v1006
        %v1075 = vadd.f32 %v1074, %v1009
        %v1076 = vadd.f32 %v1075, %v1014
        %v1077 = vadd.f32 %v1076, %v1017
        %v1078 = vadd.f32 %v1077, %v1022
        %v1079 = vadd.f32 %v1078, %v1025
        %v1080 = vadd.f32 %v1079, %v1030
        %v1081 = vadd.f32 %v1080, %v1033
        %v1082 = vadd.f32 %v1081, %v1038
        %v1083 = vadd.f32 %v1082, %v1041
        %v1084 = vadd.f32 %v1083, %v1046
        %v1085 = vadd.f32 %v1084, %v1049
        %v1086 = vrot.slane %v1085, 4
        %v1087 = vadd.f32 %v1085, %v1086
        %v1088 = vrot.slane %v1087, 2
        %v1089 = vadd.f32 %v1087, %v1088
        %v1090 = vrot.slane %v1089, 1
        %v1091 = vadd.f32 %v1089, %v1090
        %v1092 = vadd.f32 %v1070, %v1091
        %1093 = vst [vmem:[#allocation3] sm:$0x1] %v1092
        %v1094 = vld [vmem:[#allocation3 + $0x1] sm:$0x1]
        %v1095 = vmul.f32 %v990, %v990
        %v1096 = vmul.f32 %v993, %v993
        %v1097 = vmul.f32 %v998, %v998
        %v1098 = vmul.f32 %v1001, %v1001
        %v1099 = vmul.f32 %v1006, %v1006
        %v1100 = vmul.f32 %v1009, %v1009
        %v1101 = vmul.f32 %v1014, %v1014
        %v1102 = vmul.f32 %v1017, %v1017
        %v1103 = vmul.f32 %v1022, %v1022
        %v1104 = vmul.f32 %v1025, %v1025
        %v1105 = vmul.f32 %v1030, %v1030
        %v1106 = vmul.f32 %v1033, %v1033
        %v1107 = vmul.f32 %v1038, %v1038
        %v1108 = vmul.f32 %v1041, %v1041
        %v1109 = vmul.f32 %v1046, %v1046
        %v1110 = vmul.f32 %v1049, %v1049
        %v1111 = vadd.f32 %v1095, %v1096
        %v1112 = vadd.f32 %v1111, %v1097
        %v1113 = vadd.f32 %v1112, %v1098
        %v1114 = vadd.f32 %v1113, %v1099
        %v1115 = vadd.f32 %v1114, %v1100
        %v1116 = vadd.f32 %v1115, %v1101
        %v1117 = vadd.f32 %v1116, %v1102
        %v1118 = vadd.f32 %v1117, %v1103
        %v1119 = vadd.f32 %v1118, %v1104
        %v1120 = vadd.f32 %v1119, %v1105
        %v1121 = vadd.f32 %v1120, %v1106
        %v1122 = vadd.f32 %v1121, %v1107
        %v1123 = vadd.f32 %v1122, %v1108
        %v1124 = vadd.f32 %v1123, %v1109
        %v1125 = vadd.f32 %v1124, %v1110
        %v1126 = vrot.slane %v1125, 4
        %v1127 = vadd.f32 %v1125, %v1126
        %v1128 = vrot.slane %v1127, 2
        %v1129 = vadd.f32 %v1127, %v1128
        %v1130 = vrot.slane %v1129, 1
        %v1131 = vadd.f32 %v1129, %v1130
        %v1132 = vadd.f32 %v1094, %v1131
        %1133 = vst [vmem:[#allocation3 + $0x1] sm:$0x1] %v1132
        %p1134 = scmp.eq.s32.totalorder %s20, 3
        // Predicated region
        $region53: #{gin_layer.1} parent=35 // pred_check
          %p1135 = pneg %p1134
        $region54: #{gin_layer.1} parent=35 // pred_check_branch
          %1137 = sbr.rel (%p1135) target = $region56
        $region55: #{gin_layer.1} parent=35 // pred_region
          %v1138 = vld [vmem:[#allocation3] sm:$0x1]
          %v1139 = vmul.f32 %v1138, 0.001953125
          %v1140 = vld [vmem:[#allocation3 + $0x1] sm:$0x1]
          %v1141 = vmul.f32 %v1140, 0.001953125
          %v1142 = vmul.f32 %v1139, %v1139
          %v1143 = vsub.f32 %v1141, %v1142
          %v1144 = vld [vmem:[%s3] sm:$0x1]
          %v1145 = vadd.f32 %v1143, 1e-05
          %v1146 = vrsqrt.pop %v1145
          %v1147 = vmul.f32 %v1144, %v1146
          %v1148 = vld [vmem:[%s3 + $0x1] sm:$0x1]
          %v1149 = vmul.f32 %v1147, %v1139
          %v1150 = vsub.f32 %v1148, %v1149
          %v1151 = vld [vmem:[#allocation2] sm:$0xff]
          %v1152 = vld [vmem:[#allocation2 + $0x8] sm:$0xff]
          %v1153 = vld [vmem:[#allocation2 + $0x10] sm:$0xff]
          %v1154 = vld [vmem:[#allocation2 + $0x18] sm:$0xff]
          %v1155 = vld [vmem:[#allocation2 + $0x20] sm:$0xff]
          %v1156 = vld [vmem:[#allocation2 + $0x28] sm:$0xff]
          %v1157 = vld [vmem:[#allocation2 + $0x30] sm:$0xff]
          %v1158 = vld [vmem:[#allocation2 + $0x38] sm:$0xff]
          %v1159 = vld [vmem:[#allocation2 + $0x40] sm:$0xff]
          %v1160 = vld [vmem:[#allocation2 + $0x48] sm:$0xff]
          %v1161 = vld [vmem:[#allocation2 + $0x50] sm:$0xff]
          %v1162 = vld [vmem:[#allocation2 + $0x58] sm:$0xff]
          %v1163 = vld [vmem:[#allocation2 + $0x60] sm:$0xff]
          %v1164 = vld [vmem:[#allocation2 + $0x68] sm:$0xff]
          %v1165 = vld [vmem:[#allocation2 + $0x70] sm:$0xff]
          %v1166 = vld [vmem:[#allocation2 + $0x78] sm:$0xff]
          %v1167 = vld [vmem:[#allocation2 + $0x80] sm:$0xff]
          %v1168 = vld [vmem:[#allocation2 + $0x88] sm:$0xff]
          %v1169 = vld [vmem:[#allocation2 + $0x90] sm:$0xff]
          %v1170 = vld [vmem:[#allocation2 + $0x98] sm:$0xff]
          %v1171 = vld [vmem:[#allocation2 + $0xa0] sm:$0xff]
          %v1172 = vld [vmem:[#allocation2 + $0xa8] sm:$0xff]
          %v1173 = vld [vmem:[#allocation2 + $0xb0] sm:$0xff]
          %v1174 = vld [vmem:[#allocation2 + $0xb8] sm:$0xff]
          %v1175 = vld [vmem:[#allocation2 + $0xc0] sm:$0xff]
          %v1176 = vld [vmem:[#allocation2 + $0xc8] sm:$0xff]
          %v1177 = vld [vmem:[#allocation2 + $0xd0] sm:$0xff]
          %v1178 = vld [vmem:[#allocation2 + $0xd8] sm:$0xff]
          %v1179 = vld [vmem:[#allocation2 + $0xe0] sm:$0xff]
          %v1180 = vld [vmem:[#allocation2 + $0xe8] sm:$0xff]
          %v1181 = vld [vmem:[#allocation2 + $0xf0] sm:$0xff]
          %v1182 = vld [vmem:[#allocation2 + $0xf8] sm:$0xff]
          %v1183 = vld [vmem:[#allocation2 + $0x100] sm:$0xff]
          %v1184 = vld [vmem:[#allocation2 + $0x108] sm:$0xff]
          %v1185 = vld [vmem:[#allocation2 + $0x110] sm:$0xff]
          %v1186 = vld [vmem:[#allocation2 + $0x118] sm:$0xff]
          %v1187 = vld [vmem:[#allocation2 + $0x120] sm:$0xff]
          %v1188 = vld [vmem:[#allocation2 + $0x128] sm:$0xff]
          %v1189 = vld [vmem:[#allocation2 + $0x130] sm:$0xff]
          %v1190 = vld [vmem:[#allocation2 + $0x138] sm:$0xff]
          %v1191 = vld [vmem:[#allocation2 + $0x140] sm:$0xff]
          %v1192 = vld [vmem:[#allocation2 + $0x148] sm:$0xff]
          %v1193 = vld [vmem:[#allocation2 + $0x150] sm:$0xff]
          %v1194 = vld [vmem:[#allocation2 + $0x158] sm:$0xff]
          %v1195 = vld [vmem:[#allocation2 + $0x160] sm:$0xff]
          %v1196 = vld [vmem:[#allocation2 + $0x168] sm:$0xff]
          %v1197 = vld [vmem:[#allocation2 + $0x170] sm:$0xff]
          %v1198 = vld [vmem:[#allocation2 + $0x178] sm:$0xff]
          %v1199 = vld [vmem:[#allocation2 + $0x180] sm:$0xff]
          %v1200 = vld [vmem:[#allocation2 + $0x188] sm:$0xff]
          %v1201 = vld [vmem:[#allocation2 + $0x190] sm:$0xff]
          %v1202 = vld [vmem:[#allocation2 + $0x198] sm:$0xff]
          %v1203 = vld [vmem:[#allocation2 + $0x1a0] sm:$0xff]
          %v1204 = vld [vmem:[#allocation2 + $0x1a8] sm:$0xff]
          %v1205 = vld [vmem:[#allocation2 + $0x1b0] sm:$0xff]
          %v1206 = vld [vmem:[#allocation2 + $0x1b8] sm:$0xff]
          %v1207 = vld [vmem:[#allocation2 + $0x1c0] sm:$0xff]
          %v1208 = vld [vmem:[#allocation2 + $0x1c8] sm:$0xff]
          %v1209 = vld [vmem:[#allocation2 + $0x1d0] sm:$0xff]
          %v1210 = vld [vmem:[#allocation2 + $0x1d8] sm:$0xff]
          %v1211 = vld [vmem:[#allocation2 + $0x1e0] sm:$0xff]
          %v1212 = vld [vmem:[#allocation2 + $0x1e8] sm:$0xff]
          %v1213 = vld [vmem:[#allocation2 + $0x1f0] sm:$0xff]
          %v1214 = vld [vmem:[#allocation2 + $0x1f8] sm:$0xff]
          %v1215 = vlaneseq
          %v1216 = vshrl.u32 %v1215, 7
          %v1217 = vsub.s32 0, %v1216
          %v1218 = vrot.slane %v1147, %v1217
          %v1219 = vmul.f32 %v1151, %v1218
          %v1220 = vmul.f32 %v1152, %v1218
          %v1221 = vmul.f32 %v1153, %v1218
          %v1222 = vmul.f32 %v1154, %v1218
          %v1223 = vmul.f32 %v1155, %v1218
          %v1224 = vmul.f32 %v1156, %v1218
          %v1225 = vmul.f32 %v1157, %v1218
          %v1226 = vmul.f32 %v1158, %v1218
          %v1227 = vmul.f32 %v1159, %v1218
          %v1228 = vmul.f32 %v1160, %v1218
          %v1229 = vmul.f32 %v1161, %v1218
          %v1230 = vmul.f32 %v1162, %v1218
          %v1231 = vmul.f32 %v1163, %v1218
          %v1232 = vmul.f32 %v1164, %v1218
          %v1233 = vmul.f32 %v1165, %v1218
          %v1234 = vmul.f32 %v1166, %v1218
          %v1235 = vmul.f32 %v1167, %v1218
          %v1236 = vmul.f32 %v1168, %v1218
          %v1237 = vmul.f32 %v1169, %v1218
          %v1238 = vmul.f32 %v1170, %v1218
          %v1239 = vmul.f32 %v1171, %v1218
          %v1240 = vmul.f32 %v1172, %v1218
          %v1241 = vmul.f32 %v1173, %v1218
          %v1242 = vmul.f32 %v1174, %v1218
          %v1243 = vmul.f32 %v1175, %v1218
          %v1244 = vmul.f32 %v1176, %v1218
          %v1245 = vmul.f32 %v1177, %v1218
          %v1246 = vmul.f32 %v1178, %v1218
          %v1247 = vmul.f32 %v1179, %v1218
          %v1248 = vmul.f32 %v1180, %v1218
          %v1249 = vmul.f32 %v1181, %v1218
          %v1250 = vmul.f32 %v1182, %v1218
          %v1251 = vmul.f32 %v1183, %v1218
          %v1252 = vmul.f32 %v1184, %v1218
          %v1253 = vmul.f32 %v1185, %v1218
          %v1254 = vmul.f32 %v1186, %v1218
          %v1255 = vmul.f32 %v1187, %v1218
          %v1256 = vmul.f32 %v1188, %v1218
          %v1257 = vmul.f32 %v1189, %v1218
          %v1258 = vmul.f32 %v1190, %v1218
          %v1259 = vmul.f32 %v1191, %v1218
          %v1260 = vmul.f32 %v1192, %v1218
          %v1261 = vmul.f32 %v1193, %v1218
          %v1262 = vmul.f32 %v1194, %v1218
          %v1263 = vmul.f32 %v1195, %v1218
          %v1264 = vmul.f32 %v1196, %v1218
          %v1265 = vmul.f32 %v1197, %v1218
          %v1266 = vmul.f32 %v1198, %v1218
          %v1267 = vmul.f32 %v1199, %v1218
          %v1268 = vmul.f32 %v1200, %v1218
          %v1269 = vmul.f32 %v1201, %v1218
          %v1270 = vmul.f32 %v1202, %v1218
          %v1271 = vmul.f32 %v1203, %v1218
          %v1272 = vmul.f32 %v1204, %v1218
          %v1273 = vmul.f32 %v1205, %v1218
          %v1274 = vmul.f32 %v1206, %v1218
          %v1275 = vmul.f32 %v1207, %v1218
          %v1276 = vmul.f32 %v1208, %v1218
          %v1277 = vmul.f32 %v1209, %v1218
          %v1278 = vmul.f32 %v1210, %v1218
          %v1279 = vmul.f32 %v1211, %v1218
          %v1280 = vmul.f32 %v1212, %v1218
          %v1281 = vmul.f32 %v1213, %v1218
          %v1282 = vmul.f32 %v1214, %v1218
          %v1283 = vlaneseq
          %v1284 = vshrl.u32 %v1283, 7
          %v1285 = vsub.s32 0, %v1284
          %v1286 = vrot.slane %v1150, %v1285
          %v1287 = vadd.f32 %v1219, %v1286
          %v1288 = vadd.f32 %v1220, %v1286
          %v1289 = vadd.f32 %v1221, %v1286
          %v1290 = vadd.f32 %v1222, %v1286
          %v1291 = vadd.f32 %v1223, %v1286
          %v1292 = vadd.f32 %v1224, %v1286
          %v1293 = vadd.f32 %v1225, %v1286
          %v1294 = vadd.f32 %v1226, %v1286
          %v1295 = vadd.f32 %v1227, %v1286
          %v1296 = vadd.f32 %v1228, %v1286
          %v1297 = vadd.f32 %v1229, %v1286
          %v1298 = vadd.f32 %v1230, %v1286
          %v1299 = vadd.f32 %v1231, %v1286
          %v1300 = vadd.f32 %v1232, %v1286
          %v1301 = vadd.f32 %v1233, %v1286
          %v1302 = vadd.f32 %v1234, %v1286
          %v1303 = vadd.f32 %v1235, %v1286
          %v1304 = vadd.f32 %v1236, %v1286
          %v1305 = vadd.f32 %v1237, %v1286
          %v1306 = vadd.f32 %v1238, %v1286
          %v1307 = vadd.f32 %v1239, %v1286
          %v1308 = vadd.f32 %v1240, %v1286
          %v1309 = vadd.f32 %v1241, %v1286
          %v1310 = vadd.f32 %v1242, %v1286
          %v1311 = vadd.f32 %v1243, %v1286
          %v1312 = vadd.f32 %v1244, %v1286
          %v1313 = vadd.f32 %v1245, %v1286
          %v1314 = vadd.f32 %v1246, %v1286
          %v1315 = vadd.f32 %v1247, %v1286
          %v1316 = vadd.f32 %v1248, %v1286
          %v1317 = vadd.f32 %v1249, %v1286
          %v1318 = vadd.f32 %v1250, %v1286
          %v1319 = vadd.f32 %v1251, %v1286
          %v1320 = vadd.f32 %v1252, %v1286
          %v1321 = vadd.f32 %v1253, %v1286
          %v1322 = vadd.f32 %v1254, %v1286
          %v1323 = vadd.f32 %v1255, %v1286
          %v1324 = vadd.f32 %v1256, %v1286
          %v1325 = vadd.f32 %v1257, %v1286
          %v1326 = vadd.f32 %v1258, %v1286
          %v1327 = vadd.f32 %v1259, %v1286
          %v1328 = vadd.f32 %v1260, %v1286
          %v1329 = vadd.f32 %v1261, %v1286
          %v1330 = vadd.f32 %v1262, %v1286
          %v1331 = vadd.f32 %v1263, %v1286
          %v1332 = vadd.f32 %v1264, %v1286
          %v1333 = vadd.f32 %v1265, %v1286
          %v1334 = vadd.f32 %v1266, %v1286
          %v1335 = vadd.f32 %v1267, %v1286
          %v1336 = vadd.f32 %v1268, %v1286
          %v1337 = vadd.f32 %v1269, %v1286
          %v1338 = vadd.f32 %v1270, %v1286
          %v1339 = vadd.f32 %v1271, %v1286
          %v1340 = vadd.f32 %v1272, %v1286
          %v1341 = vadd.f32 %v1273, %v1286
          %v1342 = vadd.f32 %v1274, %v1286
          %v1343 = vadd.f32 %v1275, %v1286
          %v1344 = vadd.f32 %v1276, %v1286
          %v1345 = vadd.f32 %v1277, %v1286
          %v1346 = vadd.f32 %v1278, %v1286
          %v1347 = vadd.f32 %v1279, %v1286
          %v1348 = vadd.f32 %v1280, %v1286
          %v1349 = vadd.f32 %v1281, %v1286
          %v1350 = vadd.f32 %v1282, %v1286
          %v1351 = vmax.f32 %v1287, 0.0
          %v1352 = vmax.f32 %v1288, 0.0
          %v1353 = vmax.f32 %v1289, 0.0
          %v1354 = vmax.f32 %v1290, 0.0
          %v1355 = vmax.f32 %v1291, 0.0
          %v1356 = vmax.f32 %v1292, 0.0
          %v1357 = vmax.f32 %v1293, 0.0
          %v1358 = vmax.f32 %v1294, 0.0
          %v1359 = vmax.f32 %v1295, 0.0
          %v1360 = vmax.f32 %v1296, 0.0
          %v1361 = vmax.f32 %v1297, 0.0
          %v1362 = vmax.f32 %v1298, 0.0
          %v1363 = vmax.f32 %v1299, 0.0
          %v1364 = vmax.f32 %v1300, 0.0
          %v1365 = vmax.f32 %v1301, 0.0
          %v1366 = vmax.f32 %v1302, 0.0
          %v1367 = vmax.f32 %v1303, 0.0
          %v1368 = vmax.f32 %v1304, 0.0
          %v1369 = vmax.f32 %v1305, 0.0
          %v1370 = vmax.f32 %v1306, 0.0
          %v1371 = vmax.f32 %v1307, 0.0
          %v1372 = vmax.f32 %v1308, 0.0
          %v1373 = vmax.f32 %v1309, 0.0
          %v1374 = vmax.f32 %v1310, 0.0
          %v1375 = vmax.f32 %v1311, 0.0
          %v1376 = vmax.f32 %v1312, 0.0
          %v1377 = vmax.f32 %v1313, 0.0
          %v1378 = vmax.f32 %v1314, 0.0
          %v1379 = vmax.f32 %v1315, 0.0
          %v1380 = vmax.f32 %v1316, 0.0
          %v1381 = vmax.f32 %v1317, 0.0
          %v1382 = vmax.f32 %v1318, 0.0
          %v1383 = vmax.f32 %v1319, 0.0
          %v1384 = vmax.f32 %v1320, 0.0
          %v1385 = vmax.f32 %v1321, 0.0
          %v1386 = vmax.f32 %v1322, 0.0
          %v1387 = vmax.f32 %v1323, 0.0
          %v1388 = vmax.f32 %v1324, 0.0
          %v1389 = vmax.f32 %v1325, 0.0
          %v1390 = vmax.f32 %v1326, 0.0
          %v1391 = vmax.f32 %v1327, 0.0
          %v1392 = vmax.f32 %v1328, 0.0
          %v1393 = vmax.f32 %v1329, 0.0
          %v1394 = vmax.f32 %v1330, 0.0
          %v1395 = vmax.f32 %v1331, 0.0
          %v1396 = vmax.f32 %v1332, 0.0
          %v1397 = vmax.f32 %v1333, 0.0
          %v1398 = vmax.f32 %v1334, 0.0
          %v1399 = vmax.f32 %v1335, 0.0
          %v1400 = vmax.f32 %v1336, 0.0
          %v1401 = vmax.f32 %v1337, 0.0
          %v1402 = vmax.f32 %v1338, 0.0
          %v1403 = vmax.f32 %v1339, 0.0
          %v1404 = vmax.f32 %v1340, 0.0
          %v1405 = vmax.f32 %v1341, 0.0
          %v1406 = vmax.f32 %v1342, 0.0
          %v1407 = vmax.f32 %v1343, 0.0
          %v1408 = vmax.f32 %v1344, 0.0
          %v1409 = vmax.f32 %v1345, 0.0
          %v1410 = vmax.f32 %v1346, 0.0
          %v1411 = vmax.f32 %v1347, 0.0
          %v1412 = vmax.f32 %v1348, 0.0
          %v1413 = vmax.f32 %v1349, 0.0
          %v1414 = vmax.f32 %v1350, 0.0
          %v1415 = vpack.c.bf16 %v1352, %v1351
          %v1416 = vpack.c.bf16 %v1354, %v1353
          %v1417 = vpack.c.bf16 %v1356, %v1355
          %v1418 = vpack.c.bf16 %v1358, %v1357
          %v1419 = vpack.c.bf16 %v1360, %v1359
          %v1420 = vpack.c.bf16 %v1362, %v1361
          %v1421 = vpack.c.bf16 %v1364, %v1363
          %v1422 = vpack.c.bf16 %v1366, %v1365
          %v1423 = vpack.c.bf16 %v1368, %v1367
          %v1424 = vpack.c.bf16 %v1370, %v1369
          %v1425 = vpack.c.bf16 %v1372, %v1371
          %v1426 = vpack.c.bf16 %v1374, %v1373
          %v1427 = vpack.c.bf16 %v1376, %v1375
          %v1428 = vpack.c.bf16 %v1378, %v1377
          %v1429 = vpack.c.bf16 %v1380, %v1379
          %v1430 = vpack.c.bf16 %v1382, %v1381
          %v1431 = vpack.c.bf16 %v1384, %v1383
          %v1432 = vpack.c.bf16 %v1386, %v1385
          %v1433 = vpack.c.bf16 %v1388, %v1387
          %v1434 = vpack.c.bf16 %v1390, %v1389
          %v1435 = vpack.c.bf16 %v1392, %v1391
          %v1436 = vpack.c.bf16 %v1394, %v1393
          %v1437 = vpack.c.bf16 %v1396, %v1395
          %v1438 = vpack.c.bf16 %v1398, %v1397
          %v1439 = vpack.c.bf16 %v1400, %v1399
          %v1440 = vpack.c.bf16 %v1402, %v1401
          %v1441 = vpack.c.bf16 %v1404, %v1403
          %v1442 = vpack.c.bf16 %v1406, %v1405
          %v1443 = vpack.c.bf16 %v1408, %v1407
          %v1444 = vpack.c.bf16 %v1410, %v1409
          %v1445 = vpack.c.bf16 %v1412, %v1411
          %v1446 = vpack.c.bf16 %v1414, %v1413
          %v1447 = vld [vmem:[#allocation9 + $0x40] sm:$0xf]
          %v1448 = vld [vmem:[#allocation9 + $0x44] sm:$0xf]
          %v1449 = vld [vmem:[#allocation9 + $0x48] sm:$0xf]
          %v1450 = vld [vmem:[#allocation9 + $0x4c] sm:$0xf]
          %v1451 = vld [vmem:[#allocation9 + $0x50] sm:$0xf]
          %v1452 = vld [vmem:[#allocation9 + $0x54] sm:$0xf]
          %v1453 = vld [vmem:[#allocation9 + $0x58] sm:$0xf]
          %v1454 = vld [vmem:[#allocation9 + $0x5c] sm:$0xf]
          %v1455 = vld [vmem:[#allocation9 + $0x60] sm:$0xf]
          %v1456 = vld [vmem:[#allocation9 + $0x64] sm:$0xf]
          %v1457 = vld [vmem:[#allocation9 + $0x68] sm:$0xf]
          %v1458 = vld [vmem:[#allocation9 + $0x6c] sm:$0xf]
          %v1459 = vld [vmem:[#allocation9 + $0x70] sm:$0xf]
          %v1460 = vld [vmem:[#allocation9 + $0x74] sm:$0xf]
          %v1461 = vld [vmem:[#allocation9 + $0x78] sm:$0xf]
          %v1462 = vld [vmem:[#allocation9 + $0x7c] sm:$0xf]
          %v1479 = vunpack.c.l.b16 %v1447
          %v1480 = vunpack.c.l.b16 %v1448
          %v1481 = vunpack.c.l.b16 %v1449
          %v1482 = vunpack.c.l.b16 %v1450
          %v1483 = vunpack.c.l.b16 %v1451
          %v1484 = vunpack.c.l.b16 %v1452
          %v1485 = vunpack.c.l.b16 %v1453
          %v1486 = vunpack.c.l.b16 %v1454
          %v1487 = vunpack.c.l.b16 %v1455
          %v1488 = vunpack.c.l.b16 %v1456
          %v1489 = vunpack.c.l.b16 %v1457
          %v1490 = vunpack.c.l.b16 %v1458
          %v1491 = vunpack.c.l.b16 %v1459
          %v1492 = vunpack.c.l.b16 %v1460
          %v1493 = vunpack.c.l.b16 %v1461
          %v1494 = vunpack.c.l.b16 %v1462
          %v1495 = vpack.c.b16 %v1480, %v1479
          %v1496 = vpack.c.b16 %v1482, %v1481
          %v1497 = vpack.c.b16 %v1484, %v1483
          %v1498 = vpack.c.b16 %v1486, %v1485
          %v1499 = vpack.c.b16 %v1488, %v1487
          %v1500 = vpack.c.b16 %v1490, %v1489
          %v1501 = vpack.c.b16 %v1492, %v1491
          %v1502 = vpack.c.b16 %v1494, %v1493
          %1511 = vmatprep.subr.bf16.mxu0 0
          %1512 = vmatpush1.bf16.msra.mxu0 %v1502
          %1513 = vmatprep.subr.bf16.mxu0 0
          %1514 = vmatpush1.bf16.msra.mxu0 %v1501
          %1515 = vmatprep.subr.bf16.mxu0 0
          %1516 = vmatpush1.bf16.msra.mxu0 %v1500
          %1517 = vmatprep.subr.bf16.mxu0 0
          %1518 = vmatpush1.bf16.msra.mxu0 %v1499
          %1519 = vmatprep.subr.bf16.mxu0 0
          %1520 = vmatpush1.bf16.msra.mxu0 %v1498
          %1521 = vmatprep.subr.bf16.mxu0 0
          %1522 = vmatpush1.bf16.msra.mxu0 %v1497
          %1523 = vmatprep.subr.bf16.mxu0 0
          %1524 = vmatpush1.bf16.msra.mxu0 %v1496
          %1525 = vmatprep.subr.bf16.mxu0 0
          %1526 = vmatpush1.bf16.msra.mxu0 %v1495
          %1527 = vmatprep.subr.bf16.mxu0 0
          %1528 = vmatpush2.bf16.msra.mxu0 0
          %1529 = vmatprep.subr.bf16.mxu0 0
          %1530 = vmatpush2.bf16.msra.mxu0 0
          %1531 = vmatprep.subr.bf16.mxu0 0
          %1532 = vmatpush2.bf16.msra.mxu0 0
          %1533 = vmatprep.subr.bf16.mxu0 0
          %1534 = vmatpush2.bf16.msra.mxu0 0
          %1535 = vmatprep.subr.bf16.mxu0 0
          %1536 = vmatpush2.bf16.msra.mxu0 0
          %1537 = vmatprep.subr.bf16.mxu0 0
          %1538 = vmatpush2.bf16.msra.mxu0 0
          %1539 = vmatprep.subr.bf16.mxu0 0
          %1540 = vmatpush2.bf16.msra.mxu0 0
          %1541 = vmatprep.subr.bf16.mxu0 0
          %1542 = vmatpush2.bf16.msra.mxu0 0
          %1543 = vmatprep.mubr.bf16.mxu0 0
          %1544 = vmatmul.mubr.bf16.gmra.mxu0 %v1415
          %v1545 = vpop.f32.mrf.mxu0
          %v1546 = vadd.f32 0.0, %v1545
          %v1547 = vpop.f32.mrf.mxu0
          %v1548 = vpop.f32.mrf.mxu0
          %v1549 = vadd.f32 0.0, %v1548
          %v1550 = vpop.f32.mrf.mxu0
          %1551 = vmatprep.mubr.bf16.mxu0 0
          %1552 = vmatmul.mubr.bf16.gmra.mxu0 %v1416
          %v1553 = vpop.f32.mrf.mxu0
          %v1554 = vadd.f32 0.0, %v1553
          %v1555 = vpop.f32.mrf.mxu0
          %v1556 = vpop.f32.mrf.mxu0
          %v1557 = vadd.f32 0.0, %v1556
          %v1558 = vpop.f32.mrf.mxu0
          %1559 = vmatprep.mubr.bf16.mxu0 0
          %1560 = vmatmul.mubr.bf16.gmra.mxu0 %v1417
          %v1561 = vpop.f32.mrf.mxu0
          %v1562 = vadd.f32 0.0, %v1561
          %v1563 = vpop.f32.mrf.mxu0
          %v1564 = vpop.f32.mrf.mxu0
          %v1565 = vadd.f32 0.0, %v1564
          %v1566 = vpop.f32.mrf.mxu0
          %1567 = vmatprep.mubr.bf16.mxu0 0
          %1568 = vmatmul.mubr.bf16.gmra.mxu0 %v1418
          %v1569 = vpop.f32.mrf.mxu0
          %v1570 = vadd.f32 0.0, %v1569
          %v1571 = vpop.f32.mrf.mxu0
          %v1572 = vpop.f32.mrf.mxu0
          %v1573 = vadd.f32 0.0, %v1572
          %v1574 = vpop.f32.mrf.mxu0
          %1575 = vmatprep.mubr.bf16.mxu0 0
          %1576 = vmatmul.mubr.bf16.gmra.mxu0 %v1419
          %v1577 = vpop.f32.mrf.mxu0
          %v1578 = vadd.f32 0.0, %v1577
          %v1579 = vpop.f32.mrf.mxu0
          %v1580 = vpop.f32.mrf.mxu0
          %v1581 = vadd.f32 0.0, %v1580
          %v1582 = vpop.f32.mrf.mxu0
          %1583 = vmatprep.mubr.bf16.mxu0 0
          %1584 = vmatmul.mubr.bf16.gmra.mxu0 %v1420
          %v1585 = vpop.f32.mrf.mxu0
          %v1586 = vadd.f32 0.0, %v1585
          %v1587 = vpop.f32.mrf.mxu0
          %v1588 = vpop.f32.mrf.mxu0
          %v1589 = vadd.f32 0.0, %v1588
          %v1590 = vpop.f32.mrf.mxu0
          %1591 = vmatprep.mubr.bf16.mxu0 0
          %1592 = vmatmul.mubr.bf16.gmra.mxu0 %v1421
          %v1593 = vpop.f32.mrf.mxu0
          %v1594 = vadd.f32 0.0, %v1593
          %v1595 = vpop.f32.mrf.mxu0
          %v1596 = vpop.f32.mrf.mxu0
          %v1597 = vadd.f32 0.0, %v1596
          %v1598 = vpop.f32.mrf.mxu0
          %1599 = vmatprep.mubr.bf16.mxu0 0
          %1600 = vmatmul.mubr.bf16.gmra.mxu0 %v1422
          %v1601 = vpop.f32.mrf.mxu0
          %v1602 = vadd.f32 0.0, %v1601
          %v1603 = vpop.f32.mrf.mxu0
          %v1604 = vpop.f32.mrf.mxu0
          %v1605 = vadd.f32 0.0, %v1604
          %v1606 = vpop.f32.mrf.mxu0
          %1607 = vmatprep.mubr.bf16.mxu0 0
          %1608 = vmatmul.mubr.bf16.gmra.mxu0 %v1423
          %v1609 = vpop.f32.mrf.mxu0
          %v1610 = vadd.f32 0.0, %v1609
          %v1611 = vpop.f32.mrf.mxu0
          %v1612 = vpop.f32.mrf.mxu0
          %v1613 = vadd.f32 0.0, %v1612
          %v1614 = vpop.f32.mrf.mxu0
          %1615 = vmatprep.mubr.bf16.mxu0 0
          %1616 = vmatmul.mubr.bf16.gmra.mxu0 %v1424
          %v1617 = vpop.f32.mrf.mxu0
          %v1618 = vadd.f32 0.0, %v1617
          %v1619 = vpop.f32.mrf.mxu0
          %v1620 = vpop.f32.mrf.mxu0
          %v1621 = vadd.f32 0.0, %v1620
          %v1622 = vpop.f32.mrf.mxu0
          %1623 = vmatprep.mubr.bf16.mxu0 0
          %1624 = vmatmul.mubr.bf16.gmra.mxu0 %v1425
          %v1625 = vpop.f32.mrf.mxu0
          %v1626 = vadd.f32 0.0, %v1625
          %v1627 = vpop.f32.mrf.mxu0
          %v1628 = vpop.f32.mrf.mxu0
          %v1629 = vadd.f32 0.0, %v1628
          %v1630 = vpop.f32.mrf.mxu0
          %1631 = vmatprep.mubr.bf16.mxu0 0
          %1632 = vmatmul.mubr.bf16.gmra.mxu0 %v1426
          %v1633 = vpop.f32.mrf.mxu0
          %v1634 = vadd.f32 0.0, %v1633
          %v1635 = vpop.f32.mrf.mxu0
          %v1636 = vpop.f32.mrf.mxu0
          %v1637 = vadd.f32 0.0, %v1636
          %v1638 = vpop.f32.mrf.mxu0
          %1639 = vmatprep.mubr.bf16.mxu0 0
          %1640 = vmatmul.mubr.bf16.gmra.mxu0 %v1427
          %v1641 = vpop.f32.mrf.mxu0
          %v1642 = vadd.f32 0.0, %v1641
          %v1643 = vpop.f32.mrf.mxu0
          %v1644 = vpop.f32.mrf.mxu0
          %v1645 = vadd.f32 0.0, %v1644
          %v1646 = vpop.f32.mrf.mxu0
          %1647 = vmatprep.mubr.bf16.mxu0 0
          %1648 = vmatmul.mubr.bf16.gmra.mxu0 %v1428
          %v1649 = vpop.f32.mrf.mxu0
          %v1650 = vadd.f32 0.0, %v1649
          %v1651 = vpop.f32.mrf.mxu0
          %v1652 = vpop.f32.mrf.mxu0
          %v1653 = vadd.f32 0.0, %v1652
          %v1654 = vpop.f32.mrf.mxu0
          %1655 = vmatprep.mubr.bf16.mxu0 0
          %1656 = vmatmul.mubr.bf16.gmra.mxu0 %v1429
          %v1657 = vpop.f32.mrf.mxu0
          %v1658 = vadd.f32 0.0, %v1657
          %v1659 = vpop.f32.mrf.mxu0
          %v1660 = vpop.f32.mrf.mxu0
          %v1661 = vadd.f32 0.0, %v1660
          %v1662 = vpop.f32.mrf.mxu0
          %1663 = vmatprep.mubr.bf16.mxu0 0
          %1664 = vmatmul.mubr.bf16.gmra.mxu0 %v1430
          %v1665 = vpop.f32.mrf.mxu0
          %v1666 = vadd.f32 0.0, %v1665
          %v1667 = vpop.f32.mrf.mxu0
          %v1668 = vpop.f32.mrf.mxu0
          %v1669 = vadd.f32 0.0, %v1668
          %v1670 = vpop.f32.mrf.mxu0
          %1671 = vmatprep.mubr.bf16.mxu0 0
          %1672 = vmatmul.mubr.bf16.gmra.mxu0 %v1431
          %v1673 = vpop.f32.mrf.mxu0
          %v1674 = vadd.f32 0.0, %v1673
          %v1675 = vpop.f32.mrf.mxu0
          %v1676 = vpop.f32.mrf.mxu0
          %v1677 = vadd.f32 0.0, %v1676
          %v1678 = vpop.f32.mrf.mxu0
          %1679 = vmatprep.mubr.bf16.mxu0 0
          %1680 = vmatmul.mubr.bf16.gmra.mxu0 %v1432
          %v1681 = vpop.f32.mrf.mxu0
          %v1682 = vadd.f32 0.0, %v1681
          %v1683 = vpop.f32.mrf.mxu0
          %v1684 = vpop.f32.mrf.mxu0
          %v1685 = vadd.f32 0.0, %v1684
          %v1686 = vpop.f32.mrf.mxu0
          %1687 = vmatprep.mubr.bf16.mxu0 0
          %1688 = vmatmul.mubr.bf16.gmra.mxu0 %v1433
          %v1689 = vpop.f32.mrf.mxu0
          %v1690 = vadd.f32 0.0, %v1689
          %v1691 = vpop.f32.mrf.mxu0
          %v1692 = vpop.f32.mrf.mxu0
          %v1693 = vadd.f32 0.0, %v1692
          %v1694 = vpop.f32.mrf.mxu0
          %1695 = vmatprep.mubr.bf16.mxu0 0
          %1696 = vmatmul.mubr.bf16.gmra.mxu0 %v1434
          %v1697 = vpop.f32.mrf.mxu0
          %v1698 = vadd.f32 0.0, %v1697
          %v1699 = vpop.f32.mrf.mxu0
          %v1700 = vpop.f32.mrf.mxu0
          %v1701 = vadd.f32 0.0, %v1700
          %v1702 = vpop.f32.mrf.mxu0
          %1703 = vmatprep.mubr.bf16.mxu0 0
          %1704 = vmatmul.mubr.bf16.gmra.mxu0 %v1435
          %v1705 = vpop.f32.mrf.mxu0
          %v1706 = vadd.f32 0.0, %v1705
          %v1707 = vpop.f32.mrf.mxu0
          %v1708 = vpop.f32.mrf.mxu0
          %v1709 = vadd.f32 0.0, %v1708
          %v1710 = vpop.f32.mrf.mxu0
          %1711 = vmatprep.mubr.bf16.mxu0 0
          %1712 = vmatmul.mubr.bf16.gmra.mxu0 %v1436
          %v1713 = vpop.f32.mrf.mxu0
          %v1714 = vadd.f32 0.0, %v1713
          %v1715 = vpop.f32.mrf.mxu0
          %v1716 = vpop.f32.mrf.mxu0
          %v1717 = vadd.f32 0.0, %v1716
          %v1718 = vpop.f32.mrf.mxu0
          %1719 = vmatprep.mubr.bf16.mxu0 0
          %1720 = vmatmul.mubr.bf16.gmra.mxu0 %v1437
          %v1721 = vpop.f32.mrf.mxu0
          %v1722 = vadd.f32 0.0, %v1721
          %v1723 = vpop.f32.mrf.mxu0
          %v1724 = vpop.f32.mrf.mxu0
          %v1725 = vadd.f32 0.0, %v1724
          %v1726 = vpop.f32.mrf.mxu0
          %1727 = vmatprep.mubr.bf16.mxu0 0
          %1728 = vmatmul.mubr.bf16.gmra.mxu0 %v1438
          %v1729 = vpop.f32.mrf.mxu0
          %v1730 = vadd.f32 0.0, %v1729
          %v1731 = vpop.f32.mrf.mxu0
          %v1732 = vpop.f32.mrf.mxu0
          %v1733 = vadd.f32 0.0, %v1732
          %v1734 = vpop.f32.mrf.mxu0
          %1735 = vmatprep.mubr.bf16.mxu0 0
          %1736 = vmatmul.mubr.bf16.gmra.mxu0 %v1439
          %v1737 = vpop.f32.mrf.mxu0
          %v1738 = vadd.f32 0.0, %v1737
          %v1739 = vpop.f32.mrf.mxu0
          %v1740 = vpop.f32.mrf.mxu0
          %v1741 = vadd.f32 0.0, %v1740
          %v1742 = vpop.f32.mrf.mxu0
          %1743 = vmatprep.mubr.bf16.mxu0 0
          %1744 = vmatmul.mubr.bf16.gmra.mxu0 %v1440
          %v1745 = vpop.f32.mrf.mxu0
          %v1746 = vadd.f32 0.0, %v1745
          %v1747 = vpop.f32.mrf.mxu0
          %v1748 = vpop.f32.mrf.mxu0
          %v1749 = vadd.f32 0.0, %v1748
          %v1750 = vpop.f32.mrf.mxu0
          %1751 = vmatprep.mubr.bf16.mxu0 0
          %1752 = vmatmul.mubr.bf16.gmra.mxu0 %v1441
          %v1753 = vpop.f32.mrf.mxu0
          %v1754 = vadd.f32 0.0, %v1753
          %v1755 = vpop.f32.mrf.mxu0
          %v1756 = vpop.f32.mrf.mxu0
          %v1757 = vadd.f32 0.0, %v1756
          %v1758 = vpop.f32.mrf.mxu0
          %1759 = vmatprep.mubr.bf16.mxu0 0
          %1760 = vmatmul.mubr.bf16.gmra.mxu0 %v1442
          %v1761 = vpop.f32.mrf.mxu0
          %v1762 = vadd.f32 0.0, %v1761
          %v1763 = vpop.f32.mrf.mxu0
          %v1764 = vpop.f32.mrf.mxu0
          %v1765 = vadd.f32 0.0, %v1764
          %v1766 = vpop.f32.mrf.mxu0
          %1767 = vmatprep.mubr.bf16.mxu0 0
          %1768 = vmatmul.mubr.bf16.gmra.mxu0 %v1443
          %v1769 = vpop.f32.mrf.mxu0
          %v1770 = vadd.f32 0.0, %v1769
          %v1771 = vpop.f32.mrf.mxu0
          %v1772 = vpop.f32.mrf.mxu0
          %v1773 = vadd.f32 0.0, %v1772
          %v1774 = vpop.f32.mrf.mxu0
          %1775 = vmatprep.mubr.bf16.mxu0 0
          %1776 = vmatmul.mubr.bf16.gmra.mxu0 %v1444
          %v1777 = vpop.f32.mrf.mxu0
          %v1778 = vadd.f32 0.0, %v1777
          %v1779 = vpop.f32.mrf.mxu0
          %v1780 = vpop.f32.mrf.mxu0
          %v1781 = vadd.f32 0.0, %v1780
          %v1782 = vpop.f32.mrf.mxu0
          %1783 = vmatprep.mubr.bf16.mxu0 0
          %1784 = vmatmul.mubr.bf16.gmra.mxu0 %v1445
          %v1785 = vpop.f32.mrf.mxu0
          %v1786 = vadd.f32 0.0, %v1785
          %v1787 = vpop.f32.mrf.mxu0
          %v1788 = vpop.f32.mrf.mxu0
          %v1789 = vadd.f32 0.0, %v1788
          %v1790 = vpop.f32.mrf.mxu0
          %1791 = vmatprep.mubr.bf16.mxu0 0
          %1792 = vmatmul.mubr.bf16.gmra.mxu0 %v1446
          %v1793 = vpop.f32.mrf.mxu0
          %v1794 = vadd.f32 0.0, %v1793
          %v1795 = vpop.f32.mrf.mxu0
          %v1796 = vpop.f32.mrf.mxu0
          %v1797 = vadd.f32 0.0, %v1796
          %v1798 = vpop.f32.mrf.mxu0
          %1799 = vdwg.mxu0
          %v1800 = vadd.f32 %v1546, %v1549
          %v1801 = vadd.f32 %v1800, %v1554
          %v1802 = vadd.f32 %v1801, %v1557
          %v1803 = vadd.f32 %v1802, %v1562
          %v1804 = vadd.f32 %v1803, %v1565
          %v1805 = vadd.f32 %v1804, %v1570
          %v1806 = vadd.f32 %v1805, %v1573
          %v1807 = vadd.f32 %v1806, %v1578
          %v1808 = vadd.f32 %v1807, %v1581
          %v1809 = vadd.f32 %v1808, %v1586
          %v1810 = vadd.f32 %v1809, %v1589
          %v1811 = vadd.f32 %v1810, %v1594
          %v1812 = vadd.f32 %v1811, %v1597
          %v1813 = vadd.f32 %v1812, %v1602
          %v1814 = vadd.f32 %v1813, %v1605
          %v1815 = vadd.f32 %v1814, %v1610
          %v1816 = vadd.f32 %v1815, %v1613
          %v1817 = vadd.f32 %v1816, %v1618
          %v1818 = vadd.f32 %v1817, %v1621
          %v1819 = vadd.f32 %v1818, %v1626
          %v1820 = vadd.f32 %v1819, %v1629
          %v1821 = vadd.f32 %v1820, %v1634
          %v1822 = vadd.f32 %v1821, %v1637
          %v1823 = vadd.f32 %v1822, %v1642
          %v1824 = vadd.f32 %v1823, %v1645
          %v1825 = vadd.f32 %v1824, %v1650
          %v1826 = vadd.f32 %v1825, %v1653
          %v1827 = vadd.f32 %v1826, %v1658
          %v1828 = vadd.f32 %v1827, %v1661
          %v1829 = vadd.f32 %v1828, %v1666
          %v1830 = vadd.f32 %v1829, %v1669
          %v1831 = vadd.f32 %v1830, %v1674
          %v1832 = vadd.f32 %v1831, %v1677
          %v1833 = vadd.f32 %v1832, %v1682
          %v1834 = vadd.f32 %v1833, %v1685
          %v1835 = vadd.f32 %v1834, %v1690
          %v1836 = vadd.f32 %v1835, %v1693
          %v1837 = vadd.f32 %v1836, %v1698
          %v1838 = vadd.f32 %v1837, %v1701
          %v1839 = vadd.f32 %v1838, %v1706
          %v1840 = vadd.f32 %v1839, %v1709
          %v1841 = vadd.f32 %v1840, %v1714
          %v1842 = vadd.f32 %v1841, %v1717
          %v1843 = vadd.f32 %v1842, %v1722
          %v1844 = vadd.f32 %v1843, %v1725
          %v1845 = vadd.f32 %v1844, %v1730
          %v1846 = vadd.f32 %v1845, %v1733
          %v1847 = vadd.f32 %v1846, %v1738
          %v1848 = vadd.f32 %v1847, %v1741
          %v1849 = vadd.f32 %v1848, %v1746
          %v1850 = vadd.f32 %v1849, %v1749
          %v1851 = vadd.f32 %v1850, %v1754
          %v1852 = vadd.f32 %v1851, %v1757
          %v1853 = vadd.f32 %v1852, %v1762
          %v1854 = vadd.f32 %v1853, %v1765
          %v1855 = vadd.f32 %v1854, %v1770
          %v1856 = vadd.f32 %v1855, %v1773
          %v1857 = vadd.f32 %v1856, %v1778
          %v1858 = vadd.f32 %v1857, %v1781
          %v1859 = vadd.f32 %v1858, %v1786
          %v1860 = vadd.f32 %v1859, %v1789
          %v1861 = vadd.f32 %v1860, %v1794
          %v1862 = vadd.f32 %v1861, %v1797
          %v1863 = vrot.slane %v1862, 4
          %v1864 = vadd.f32 %v1862, %v1863
          %v1865 = vrot.slane %v1864, 2
          %v1866 = vadd.f32 %v1864, %v1865
          %v1867 = vrot.slane %v1866, 1
          %v1868 = vadd.f32 %v1866, %v1867
          %v1869 = vrcp.pop 512.0
          %v1870 = vmul.f32 %v1868, %v1869
          %v1871 = vmul.f32 %v1546, %v1546
          %v1872 = vmul.f32 %v1549, %v1549
          %v1873 = vmul.f32 %v1554, %v1554
          %v1874 = vmul.f32 %v1557, %v1557
          %v1875 = vmul.f32 %v1562, %v1562
          %v1876 = vmul.f32 %v1565, %v1565
          %v1877 = vmul.f32 %v1570, %v1570
          %v1878 = vmul.f32 %v1573, %v1573
          %v1879 = vmul.f32 %v1578, %v1578
          %v1880 = vmul.f32 %v1581, %v1581
          %v1881 = vmul.f32 %v1586, %v1586
          %v1882 = vmul.f32 %v1589, %v1589
          %v1883 = vmul.f32 %v1594, %v1594
          %v1884 = vmul.f32 %v1597, %v1597
          %v1885 = vmul.f32 %v1602, %v1602
          %v1886 = vmul.f32 %v1605, %v1605
          %v1887 = vmul.f32 %v1610, %v1610
          %v1888 = vmul.f32 %v1613, %v1613
          %v1889 = vmul.f32 %v1618, %v1618
          %v1890 = vmul.f32 %v1621, %v1621
          %v1891 = vmul.f32 %v1626, %v1626
          %v1892 = vmul.f32 %v1629, %v1629
          %v1893 = vmul.f32 %v1634, %v1634
          %v1894 = vmul.f32 %v1637, %v1637
          %v1895 = vmul.f32 %v1642, %v1642
          %v1896 = vmul.f32 %v1645, %v1645
          %v1897 = vmul.f32 %v1650, %v1650
          %v1898 = vmul.f32 %v1653, %v1653
          %v1899 = vmul.f32 %v1658, %v1658
          %v1900 = vmul.f32 %v1661, %v1661
          %v1901 = vmul.f32 %v1666, %v1666
          %v1902 = vmul.f32 %v1669, %v1669
          %v1903 = vmul.f32 %v1674, %v1674
          %v1904 = vmul.f32 %v1677, %v1677
          %v1905 = vmul.f32 %v1682, %v1682
          %v1906 = vmul.f32 %v1685, %v1685
          %v1907 = vmul.f32 %v1690, %v1690
          %v1908 = vmul.f32 %v1693, %v1693
          %v1909 = vmul.f32 %v1698, %v1698
          %v1910 = vmul.f32 %v1701, %v1701
          %v1911 = vmul.f32 %v1706, %v1706
          %v1912 = vmul.f32 %v1709, %v1709
          %v1913 = vmul.f32 %v1714, %v1714
          %v1914 = vmul.f32 %v1717, %v1717
          %v1915 = vmul.f32 %v1722, %v1722
          %v1916 = vmul.f32 %v1725, %v1725
          %v1917 = vmul.f32 %v1730, %v1730
          %v1918 = vmul.f32 %v1733, %v1733
          %v1919 = vmul.f32 %v1738, %v1738
          %v1920 = vmul.f32 %v1741, %v1741
          %v1921 = vmul.f32 %v1746, %v1746
          %v1922 = vmul.f32 %v1749, %v1749
          %v1923 = vmul.f32 %v1754, %v1754
          %v1924 = vmul.f32 %v1757, %v1757
          %v1925 = vmul.f32 %v1762, %v1762
          %v1926 = vmul.f32 %v1765, %v1765
          %v1927 = vmul.f32 %v1770, %v1770
          %v1928 = vmul.f32 %v1773, %v1773
          %v1929 = vmul.f32 %v1778, %v1778
          %v1930 = vmul.f32 %v1781, %v1781
          %v1931 = vmul.f32 %v1786, %v1786
          %v1932 = vmul.f32 %v1789, %v1789
          %v1933 = vmul.f32 %v1794, %v1794
          %v1934 = vmul.f32 %v1797, %v1797
          %v1935 = vadd.f32 %v1871, %v1872
          %v1936 = vadd.f32 %v1935, %v1873
          %v1937 = vadd.f32 %v1936, %v1874
          %v1938 = vadd.f32 %v1937, %v1875
          %v1939 = vadd.f32 %v1938, %v1876
          %v1940 = vadd.f32 %v1939, %v1877
          %v1941 = vadd.f32 %v1940, %v1878
          %v1942 = vadd.f32 %v1941, %v1879
          %v1943 = vadd.f32 %v1942, %v1880
          %v1944 = vadd.f32 %v1943, %v1881
          %v1945 = vadd.f32 %v1944, %v1882
          %v1946 = vadd.f32 %v1945, %v1883
          %v1947 = vadd.f32 %v1946, %v1884
          %v1948 = vadd.f32 %v1947, %v1885
          %v1949 = vadd.f32 %v1948, %v1886
          %v1950 = vadd.f32 %v1949, %v1887
          %v1951 = vadd.f32 %v1950, %v1888
          %v1952 = vadd.f32 %v1951, %v1889
          %v1953 = vadd.f32 %v1952, %v1890
          %v1954 = vadd.f32 %v1953, %v1891
          %v1955 = vadd.f32 %v1954, %v1892
          %v1956 = vadd.f32 %v1955, %v1893
          %v1957 = vadd.f32 %v1956, %v1894
          %v1958 = vadd.f32 %v1957, %v1895
          %v1959 = vadd.f32 %v1958, %v1896
          %v1960 = vadd.f32 %v1959, %v1897
          %v1961 = vadd.f32 %v1960, %v1898
          %v1962 = vadd.f32 %v1961, %v1899
          %v1963 = vadd.f32 %v1962, %v1900
          %v1964 = vadd.f32 %v1963, %v1901
          %v1965 = vadd.f32 %v1964, %v1902
          %v1966 = vadd.f32 %v1965, %v1903
          %v1967 = vadd.f32 %v1966, %v1904
          %v1968 = vadd.f32 %v1967, %v1905
          %v1969 = vadd.f32 %v1968, %v1906
          %v1970 = vadd.f32 %v1969, %v1907
          %v1971 = vadd.f32 %v1970, %v1908
          %v1972 = vadd.f32 %v1971, %v1909
          %v1973 = vadd.f32 %v1972, %v1910
          %v1974 = vadd.f32 %v1973, %v1911
          %v1975 = vadd.f32 %v1974, %v1912
          %v1976 = vadd.f32 %v1975, %v1913
          %v1977 = vadd.f32 %v1976, %v1914
          %v1978 = vadd.f32 %v1977, %v1915
          %v1979 = vadd.f32 %v1978, %v1916
          %v1980 = vadd.f32 %v1979, %v1917
          %v1981 = vadd.f32 %v1980, %v1918
          %v1982 = vadd.f32 %v1981, %v1919
          %v1983 = vadd.f32 %v1982, %v1920
          %v1984 = vadd.f32 %v1983, %v1921
          %v1985 = vadd.f32 %v1984, %v1922
          %v1986 = vadd.f32 %v1985, %v1923
          %v1987 = vadd.f32 %v1986, %v1924
          %v1988 = vadd.f32 %v1987, %v1925
          %v1989 = vadd.f32 %v1988, %v1926
          %v1990 = vadd.f32 %v1989, %v1927
          %v1991 = vadd.f32 %v1990, %v1928
          %v1992 = vadd.f32 %v1991, %v1929
          %v1993 = vadd.f32 %v1992, %v1930
          %v1994 = vadd.f32 %v1993, %v1931
          %v1995 = vadd.f32 %v1994, %v1932
          %v1996 = vadd.f32 %v1995, %v1933
          %v1997 = vadd.f32 %v1996, %v1934
          %v1998 = vrot.slane %v1997, 4
          %v1999 = vadd.f32 %v1997, %v1998
          %v2000 = vrot.slane %v1999, 2
          %v2001 = vadd.f32 %v1999, %v2000
          %v2002 = vrot.slane %v2001, 1
          %v2003 = vadd.f32 %v2001, %v2002
          %v2004 = vmul.f32 %v2003, %v1869
          %v2005 = vmul.f32 %v1870, %v1870
          %v2006 = vsub.f32 %v2004, %v2005
          %v2007 = vld [vmem:[%s3 + $0x2] sm:$0x1]
          %v2008 = vadd.f32 %v2006, 1e-05
          %v2009 = vrsqrt.pop %v2008
          %v2010 = vmul.f32 %v2007, %v2009
          %v2011 = vld [vmem:[%s3 + $0x3] sm:$0x1]
          %v2012 = vmul.f32 %v2010, %v1870
          %v2013 = vsub.f32 %v2011, %v2012
          %v2014 = vlaneseq
          %v2015 = vshrl.u32 %v2014, 7
          %v2016 = vsub.s32 0, %v2015
          %v2017 = vrot.slane %v2010, %v2016
          %v2018 = vmul.f32 %v1546, %v2017
          %v2019 = vmul.f32 %v1549, %v2017
          %v2020 = vmul.f32 %v1554, %v2017
          %v2021 = vmul.f32 %v1557, %v2017
          %v2022 = vmul.f32 %v1562, %v2017
          %v2023 = vmul.f32 %v1565, %v2017
          %v2024 = vmul.f32 %v1570, %v2017
          %v2025 = vmul.f32 %v1573, %v2017
          %v2026 = vmul.f32 %v1578, %v2017
          %v2027 = vmul.f32 %v1581, %v2017
          %v2028 = vmul.f32 %v1586, %v2017
          %v2029 = vmul.f32 %v1589, %v2017
          %v2030 = vmul.f32 %v1594, %v2017
          %v2031 = vmul.f32 %v1597, %v2017
          %v2032 = vmul.f32 %v1602, %v2017
          %v2033 = vmul.f32 %v1605, %v2017
          %v2034 = vmul.f32 %v1610, %v2017
          %v2035 = vmul.f32 %v1613, %v2017
          %v2036 = vmul.f32 %v1618, %v2017
          %v2037 = vmul.f32 %v1621, %v2017
          %v2038 = vmul.f32 %v1626, %v2017
          %v2039 = vmul.f32 %v1629, %v2017
          %v2040 = vmul.f32 %v1634, %v2017
          %v2041 = vmul.f32 %v1637, %v2017
          %v2042 = vmul.f32 %v1642, %v2017
          %v2043 = vmul.f32 %v1645, %v2017
          %v2044 = vmul.f32 %v1650, %v2017
          %v2045 = vmul.f32 %v1653, %v2017
          %v2046 = vmul.f32 %v1658, %v2017
          %v2047 = vmul.f32 %v1661, %v2017
          %v2048 = vmul.f32 %v1666, %v2017
          %v2049 = vmul.f32 %v1669, %v2017
          %v2050 = vmul.f32 %v1674, %v2017
          %v2051 = vmul.f32 %v1677, %v2017
          %v2052 = vmul.f32 %v1682, %v2017
          %v2053 = vmul.f32 %v1685, %v2017
          %v2054 = vmul.f32 %v1690, %v2017
          %v2055 = vmul.f32 %v1693, %v2017
          %v2056 = vmul.f32 %v1698, %v2017
          %v2057 = vmul.f32 %v1701, %v2017
          %v2058 = vmul.f32 %v1706, %v2017
          %v2059 = vmul.f32 %v1709, %v2017
          %v2060 = vmul.f32 %v1714, %v2017
          %v2061 = vmul.f32 %v1717, %v2017
          %v2062 = vmul.f32 %v1722, %v2017
          %v2063 = vmul.f32 %v1725, %v2017
          %v2064 = vmul.f32 %v1730, %v2017
          %v2065 = vmul.f32 %v1733, %v2017
          %v2066 = vmul.f32 %v1738, %v2017
          %v2067 = vmul.f32 %v1741, %v2017
          %v2068 = vmul.f32 %v1746, %v2017
          %v2069 = vmul.f32 %v1749, %v2017
          %v2070 = vmul.f32 %v1754, %v2017
          %v2071 = vmul.f32 %v1757, %v2017
          %v2072 = vmul.f32 %v1762, %v2017
          %v2073 = vmul.f32 %v1765, %v2017
          %v2074 = vmul.f32 %v1770, %v2017
          %v2075 = vmul.f32 %v1773, %v2017
          %v2076 = vmul.f32 %v1778, %v2017
          %v2077 = vmul.f32 %v1781, %v2017
          %v2078 = vmul.f32 %v1786, %v2017
          %v2079 = vmul.f32 %v1789, %v2017
          %v2080 = vmul.f32 %v1794, %v2017
          %v2081 = vmul.f32 %v1797, %v2017
          %v2082 = vlaneseq
          %v2083 = vshrl.u32 %v2082, 7
          %v2084 = vsub.s32 0, %v2083
          %v2085 = vrot.slane %v2013, %v2084
          %v2086 = vadd.f32 %v2018, %v2085
          %v2087 = vadd.f32 %v2019, %v2085
          %v2088 = vadd.f32 %v2020, %v2085
          %v2089 = vadd.f32 %v2021, %v2085
          %v2090 = vadd.f32 %v2022, %v2085
          %v2091 = vadd.f32 %v2023, %v2085
          %v2092 = vadd.f32 %v2024, %v2085
          %v2093 = vadd.f32 %v2025, %v2085
          %v2094 = vadd.f32 %v2026, %v2085
          %v2095 = vadd.f32 %v2027, %v2085
          %v2096 = vadd.f32 %v2028, %v2085
          %v2097 = vadd.f32 %v2029, %v2085
          %v2098 = vadd.f32 %v2030, %v2085
          %v2099 = vadd.f32 %v2031, %v2085
          %v2100 = vadd.f32 %v2032, %v2085
          %v2101 = vadd.f32 %v2033, %v2085
          %v2102 = vadd.f32 %v2034, %v2085
          %v2103 = vadd.f32 %v2035, %v2085
          %v2104 = vadd.f32 %v2036, %v2085
          %v2105 = vadd.f32 %v2037, %v2085
          %v2106 = vadd.f32 %v2038, %v2085
          %v2107 = vadd.f32 %v2039, %v2085
          %v2108 = vadd.f32 %v2040, %v2085
          %v2109 = vadd.f32 %v2041, %v2085
          %v2110 = vadd.f32 %v2042, %v2085
          %v2111 = vadd.f32 %v2043, %v2085
          %v2112 = vadd.f32 %v2044, %v2085
          %v2113 = vadd.f32 %v2045, %v2085
          %v2114 = vadd.f32 %v2046, %v2085
          %v2115 = vadd.f32 %v2047, %v2085
          %v2116 = vadd.f32 %v2048, %v2085
          %v2117 = vadd.f32 %v2049, %v2085
          %v2118 = vadd.f32 %v2050, %v2085
          %v2119 = vadd.f32 %v2051, %v2085
          %v2120 = vadd.f32 %v2052, %v2085
          %v2121 = vadd.f32 %v2053, %v2085
          %v2122 = vadd.f32 %v2054, %v2085
          %v2123 = vadd.f32 %v2055, %v2085
          %v2124 = vadd.f32 %v2056, %v2085
          %v2125 = vadd.f32 %v2057, %v2085
          %v2126 = vadd.f32 %v2058, %v2085
          %v2127 = vadd.f32 %v2059, %v2085
          %v2128 = vadd.f32 %v2060, %v2085
          %v2129 = vadd.f32 %v2061, %v2085
          %v2130 = vadd.f32 %v2062, %v2085
          %v2131 = vadd.f32 %v2063, %v2085
          %v2132 = vadd.f32 %v2064, %v2085
          %v2133 = vadd.f32 %v2065, %v2085
          %v2134 = vadd.f32 %v2066, %v2085
          %v2135 = vadd.f32 %v2067, %v2085
          %v2136 = vadd.f32 %v2068, %v2085
          %v2137 = vadd.f32 %v2069, %v2085
          %v2138 = vadd.f32 %v2070, %v2085
          %v2139 = vadd.f32 %v2071, %v2085
          %v2140 = vadd.f32 %v2072, %v2085
          %v2141 = vadd.f32 %v2073, %v2085
          %v2142 = vadd.f32 %v2074, %v2085
          %v2143 = vadd.f32 %v2075, %v2085
          %v2144 = vadd.f32 %v2076, %v2085
          %v2145 = vadd.f32 %v2077, %v2085
          %v2146 = vadd.f32 %v2078, %v2085
          %v2147 = vadd.f32 %v2079, %v2085
          %v2148 = vadd.f32 %v2080, %v2085
          %v2149 = vadd.f32 %v2081, %v2085
          %v2150 = vmax.f32 %v2086, 0.0
          %v2151 = vmax.f32 %v2087, 0.0
          %v2152 = vmax.f32 %v2088, 0.0
          %v2153 = vmax.f32 %v2089, 0.0
          %v2154 = vmax.f32 %v2090, 0.0
          %v2155 = vmax.f32 %v2091, 0.0
          %v2156 = vmax.f32 %v2092, 0.0
          %v2157 = vmax.f32 %v2093, 0.0
          %v2158 = vmax.f32 %v2094, 0.0
          %v2159 = vmax.f32 %v2095, 0.0
          %v2160 = vmax.f32 %v2096, 0.0
          %v2161 = vmax.f32 %v2097, 0.0
          %v2162 = vmax.f32 %v2098, 0.0
          %v2163 = vmax.f32 %v2099, 0.0
          %v2164 = vmax.f32 %v2100, 0.0
          %v2165 = vmax.f32 %v2101, 0.0
          %v2166 = vmax.f32 %v2102, 0.0
          %v2167 = vmax.f32 %v2103, 0.0
          %v2168 = vmax.f32 %v2104, 0.0
          %v2169 = vmax.f32 %v2105, 0.0
          %v2170 = vmax.f32 %v2106, 0.0
          %v2171 = vmax.f32 %v2107, 0.0
          %v2172 = vmax.f32 %v2108, 0.0
          %v2173 = vmax.f32 %v2109, 0.0
          %v2174 = vmax.f32 %v2110, 0.0
          %v2175 = vmax.f32 %v2111, 0.0
          %v2176 = vmax.f32 %v2112, 0.0
          %v2177 = vmax.f32 %v2113, 0.0
          %v2178 = vmax.f32 %v2114, 0.0
          %v2179 = vmax.f32 %v2115, 0.0
          %v2180 = vmax.f32 %v2116, 0.0
          %v2181 = vmax.f32 %v2117, 0.0
          %v2182 = vmax.f32 %v2118, 0.0
          %v2183 = vmax.f32 %v2119, 0.0
          %v2184 = vmax.f32 %v2120, 0.0
          %v2185 = vmax.f32 %v2121, 0.0
          %v2186 = vmax.f32 %v2122, 0.0
          %v2187 = vmax.f32 %v2123, 0.0
          %v2188 = vmax.f32 %v2124, 0.0
          %v2189 = vmax.f32 %v2125, 0.0
          %v2190 = vmax.f32 %v2126, 0.0
          %v2191 = vmax.f32 %v2127, 0.0
          %v2192 = vmax.f32 %v2128, 0.0
          %v2193 = vmax.f32 %v2129, 0.0
          %v2194 = vmax.f32 %v2130, 0.0
          %v2195 = vmax.f32 %v2131, 0.0
          %v2196 = vmax.f32 %v2132, 0.0
          %v2197 = vmax.f32 %v2133, 0.0
          %v2198 = vmax.f32 %v2134, 0.0
          %v2199 = vmax.f32 %v2135, 0.0
          %v2200 = vmax.f32 %v2136, 0.0
          %v2201 = vmax.f32 %v2137, 0.0
          %v2202 = vmax.f32 %v2138, 0.0
          %v2203 = vmax.f32 %v2139, 0.0
          %v2204 = vmax.f32 %v2140, 0.0
          %v2205 = vmax.f32 %v2141, 0.0
          %v2206 = vmax.f32 %v2142, 0.0
          %v2207 = vmax.f32 %v2143, 0.0
          %v2208 = vmax.f32 %v2144, 0.0
          %v2209 = vmax.f32 %v2145, 0.0
          %v2210 = vmax.f32 %v2146, 0.0
          %v2211 = vmax.f32 %v2147, 0.0
          %v2212 = vmax.f32 %v2148, 0.0
          %v2213 = vmax.f32 %v2149, 0.0
          %v2214 = vpack.c.bf16 %v2151, %v2150
          %v2215 = vpack.c.bf16 %v2153, %v2152
          %v2216 = vpack.c.bf16 %v2155, %v2154
          %v2217 = vpack.c.bf16 %v2157, %v2156
          %v2218 = vpack.c.bf16 %v2159, %v2158
          %v2219 = vpack.c.bf16 %v2161, %v2160
          %v2220 = vpack.c.bf16 %v2163, %v2162
          %v2221 = vpack.c.bf16 %v2165, %v2164
          %v2222 = vpack.c.bf16 %v2167, %v2166
          %v2223 = vpack.c.bf16 %v2169, %v2168
          %v2224 = vpack.c.bf16 %v2171, %v2170
          %v2225 = vpack.c.bf16 %v2173, %v2172
          %v2226 = vpack.c.bf16 %v2175, %v2174
          %v2227 = vpack.c.bf16 %v2177, %v2176
          %v2228 = vpack.c.bf16 %v2179, %v2178
          %v2229 = vpack.c.bf16 %v2181, %v2180
          %v2230 = vpack.c.bf16 %v2183, %v2182
          %v2231 = vpack.c.bf16 %v2185, %v2184
          %v2232 = vpack.c.bf16 %v2187, %v2186
          %v2233 = vpack.c.bf16 %v2189, %v2188
          %v2234 = vpack.c.bf16 %v2191, %v2190
          %v2235 = vpack.c.bf16 %v2193, %v2192
          %v2236 = vpack.c.bf16 %v2195, %v2194
          %v2237 = vpack.c.bf16 %v2197, %v2196
          %v2238 = vpack.c.bf16 %v2199, %v2198
          %v2239 = vpack.c.bf16 %v2201, %v2200
          %v2240 = vpack.c.bf16 %v2203, %v2202
          %v2241 = vpack.c.bf16 %v2205, %v2204
          %v2242 = vpack.c.bf16 %v2207, %v2206
          %v2243 = vpack.c.bf16 %v2209, %v2208
          %v2244 = vpack.c.bf16 %v2211, %v2210
          %v2245 = vpack.c.bf16 %v2213, %v2212
          %v2278 = vunpack.c.l.b16 %v2214
          %v2279 = vunpack.c.h.b16 %v2214
          %v2280 = vunpack.c.l.b16 %v2215
          %v2281 = vunpack.c.h.b16 %v2215
          %v2282 = vunpack.c.l.b16 %v2216
          %v2283 = vunpack.c.h.b16 %v2216
          %v2284 = vunpack.c.l.b16 %v2217
          %v2285 = vunpack.c.h.b16 %v2217
          %v2286 = vunpack.c.l.b16 %v2218
          %v2287 = vunpack.c.h.b16 %v2218
          %v2288 = vunpack.c.l.b16 %v2219
          %v2289 = vunpack.c.h.b16 %v2219
          %v2290 = vunpack.c.l.b16 %v2220
          %v2291 = vunpack.c.h.b16 %v2220
          %v2292 = vunpack.c.l.b16 %v2221
          %v2293 = vunpack.c.h.b16 %v2221
          %v2294 = vunpack.c.l.b16 %v2222
          %v2295 = vunpack.c.h.b16 %v2222
          %v2296 = vunpack.c.l.b16 %v2223
          %v2297 = vunpack.c.h.b16 %v2223
          %v2298 = vunpack.c.l.b16 %v2224
          %v2299 = vunpack.c.h.b16 %v2224
          %v2300 = vunpack.c.l.b16 %v2225
          %v2301 = vunpack.c.h.b16 %v2225
          %v2302 = vunpack.c.l.b16 %v2226
          %v2303 = vunpack.c.h.b16 %v2226
          %v2304 = vunpack.c.l.b16 %v2227
          %v2305 = vunpack.c.h.b16 %v2227
          %v2306 = vunpack.c.l.b16 %v2228
          %v2307 = vunpack.c.h.b16 %v2228
          %v2308 = vunpack.c.l.b16 %v2229
          %v2309 = vunpack.c.h.b16 %v2229
          %v2310 = vunpack.c.l.b16 %v2230
          %v2311 = vunpack.c.h.b16 %v2230
          %v2312 = vunpack.c.l.b16 %v2231
          %v2313 = vunpack.c.h.b16 %v2231
          %v2314 = vunpack.c.l.b16 %v2232
          %v2315 = vunpack.c.h.b16 %v2232
          %v2316 = vunpack.c.l.b16 %v2233
          %v2317 = vunpack.c.h.b16 %v2233
          %v2318 = vunpack.c.l.b16 %v2234
          %v2319 = vunpack.c.h.b16 %v2234
          %v2320 = vunpack.c.l.b16 %v2235
          %v2321 = vunpack.c.h.b16 %v2235
          %v2322 = vunpack.c.l.b16 %v2236
          %v2323 = vunpack.c.h.b16 %v2236
          %v2324 = vunpack.c.l.b16 %v2237
          %v2325 = vunpack.c.h.b16 %v2237
          %v2326 = vunpack.c.l.b16 %v2238
          %v2327 = vunpack.c.h.b16 %v2238
          %v2328 = vunpack.c.l.b16 %v2239
          %v2329 = vunpack.c.h.b16 %v2239
          %v2330 = vunpack.c.l.b16 %v2240
          %v2331 = vunpack.c.h.b16 %v2240
          %v2332 = vunpack.c.l.b16 %v2241
          %v2333 = vunpack.c.h.b16 %v2241
          %v2334 = vunpack.c.l.b16 %v2242
          %v2335 = vunpack.c.h.b16 %v2242
          %v2336 = vunpack.c.l.b16 %v2243
          %v2337 = vunpack.c.h.b16 %v2243
          %v2338 = vunpack.c.l.b16 %v2244
          %v2339 = vunpack.c.h.b16 %v2244
          %v2340 = vunpack.c.l.b16 %v2245
          %v2341 = vunpack.c.h.b16 %v2245
          %v2342 = vpack.c.b16 %v2278, %v2278
          %v2343 = vpack.c.b16 %v2279, %v2279
          %v2344 = vpack.c.b16 %v2280, %v2280
          %v2345 = vpack.c.b16 %v2281, %v2281
          %v2346 = vpack.c.b16 %v2282, %v2282
          %v2347 = vpack.c.b16 %v2283, %v2283
          %v2348 = vpack.c.b16 %v2284, %v2284
          %v2349 = vpack.c.b16 %v2285, %v2285
          %v2350 = vpack.c.b16 %v2286, %v2286
          %v2351 = vpack.c.b16 %v2287, %v2287
          %v2352 = vpack.c.b16 %v2288, %v2288
          %v2353 = vpack.c.b16 %v2289, %v2289
          %v2354 = vpack.c.b16 %v2290, %v2290
          %v2355 = vpack.c.b16 %v2291, %v2291
          %v2356 = vpack.c.b16 %v2292, %v2292
          %v2357 = vpack.c.b16 %v2293, %v2293
          %v2358 = vpack.c.b16 %v2294, %v2294
          %v2359 = vpack.c.b16 %v2295, %v2295
          %v2360 = vpack.c.b16 %v2296, %v2296
          %v2361 = vpack.c.b16 %v2297, %v2297
          %v2362 = vpack.c.b16 %v2298, %v2298
          %v2363 = vpack.c.b16 %v2299, %v2299
          %v2364 = vpack.c.b16 %v2300, %v2300
          %v2365 = vpack.c.b16 %v2301, %v2301
          %v2366 = vpack.c.b16 %v2302, %v2302
          %v2367 = vpack.c.b16 %v2303, %v2303
          %v2368 = vpack.c.b16 %v2304, %v2304
          %v2369 = vpack.c.b16 %v2305, %v2305
          %v2370 = vpack.c.b16 %v2306, %v2306
          %v2371 = vpack.c.b16 %v2307, %v2307
          %v2372 = vpack.c.b16 %v2308, %v2308
          %v2373 = vpack.c.b16 %v2309, %v2309
          %v2374 = vpack.c.b16 %v2310, %v2310
          %v2375 = vpack.c.b16 %v2311, %v2311
          %v2376 = vpack.c.b16 %v2312, %v2312
          %v2377 = vpack.c.b16 %v2313, %v2313
          %v2378 = vpack.c.b16 %v2314, %v2314
          %v2379 = vpack.c.b16 %v2315, %v2315
          %v2380 = vpack.c.b16 %v2316, %v2316
          %v2381 = vpack.c.b16 %v2317, %v2317
          %v2382 = vpack.c.b16 %v2318, %v2318
          %v2383 = vpack.c.b16 %v2319, %v2319
          %v2384 = vpack.c.b16 %v2320, %v2320
          %v2385 = vpack.c.b16 %v2321, %v2321
          %v2386 = vpack.c.b16 %v2322, %v2322
          %v2387 = vpack.c.b16 %v2323, %v2323
          %v2388 = vpack.c.b16 %v2324, %v2324
          %v2389 = vpack.c.b16 %v2325, %v2325
          %v2390 = vpack.c.b16 %v2326, %v2326
          %v2391 = vpack.c.b16 %v2327, %v2327
          %v2392 = vpack.c.b16 %v2328, %v2328
          %v2393 = vpack.c.b16 %v2329, %v2329
          %v2394 = vpack.c.b16 %v2330, %v2330
          %v2395 = vpack.c.b16 %v2331, %v2331
          %v2396 = vpack.c.b16 %v2332, %v2332
          %v2397 = vpack.c.b16 %v2333, %v2333
          %v2398 = vpack.c.b16 %v2334, %v2334
          %v2399 = vpack.c.b16 %v2335, %v2335
          %v2400 = vpack.c.b16 %v2336, %v2336
          %v2401 = vpack.c.b16 %v2337, %v2337
          %v2402 = vpack.c.b16 %v2338, %v2338
          %v2403 = vpack.c.b16 %v2339, %v2339
          %v2404 = vpack.c.b16 %v2340, %v2340
          %v2405 = vpack.c.b16 %v2341, %v2341
          %2470 = vst [vmem:[#allocation10] sm:$0xf] %v2342
          %2471 = vst [vmem:[#allocation10 + $0x4] sm:$0xf] %v2343
          %2472 = vst [vmem:[#allocation10 + $0x8] sm:$0xf] %v2344
          %2473 = vst [vmem:[#allocation10 + $0xc] sm:$0xf] %v2345
          %2474 = vst [vmem:[#allocation10 + $0x10] sm:$0xf] %v2346
          %2475 = vst [vmem:[#allocation10 + $0x14] sm:$0xf] %v2347
          %2476 = vst [vmem:[#allocation10 + $0x18] sm:$0xf] %v2348
          %2477 = vst [vmem:[#allocation10 + $0x1c] sm:$0xf] %v2349
          %2478 = vst [vmem:[#allocation10 + $0x20] sm:$0xf] %v2350
          %2479 = vst [vmem:[#allocation10 + $0x24] sm:$0xf] %v2351
          %2480 = vst [vmem:[#allocation10 + $0x28] sm:$0xf] %v2352
          %2481 = vst [vmem:[#allocation10 + $0x2c] sm:$0xf] %v2353
          %2482 = vst [vmem:[#allocation10 + $0x30] sm:$0xf] %v2354
          %2483 = vst [vmem:[#allocation10 + $0x34] sm:$0xf] %v2355
          %2484 = vst [vmem:[#allocation10 + $0x38] sm:$0xf] %v2356
          %2485 = vst [vmem:[#allocation10 + $0x3c] sm:$0xf] %v2357
          %2486 = vst [vmem:[#allocation10 + $0x40] sm:$0xf] %v2358
          %2487 = vst [vmem:[#allocation10 + $0x44] sm:$0xf] %v2359
          %2488 = vst [vmem:[#allocation10 + $0x48] sm:$0xf] %v2360
          %2489 = vst [vmem:[#allocation10 + $0x4c] sm:$0xf] %v2361
          %2490 = vst [vmem:[#allocation10 + $0x50] sm:$0xf] %v2362
          %2491 = vst [vmem:[#allocation10 + $0x54] sm:$0xf] %v2363
          %2492 = vst [vmem:[#allocation10 + $0x58] sm:$0xf] %v2364
          %2493 = vst [vmem:[#allocation10 + $0x5c] sm:$0xf] %v2365
          %2494 = vst [vmem:[#allocation10 + $0x60] sm:$0xf] %v2366
          %2495 = vst [vmem:[#allocation10 + $0x64] sm:$0xf] %v2367
          %2496 = vst [vmem:[#allocation10 + $0x68] sm:$0xf] %v2368
          %2497 = vst [vmem:[#allocation10 + $0x6c] sm:$0xf] %v2369
          %2498 = vst [vmem:[#allocation10 + $0x70] sm:$0xf] %v2370
          %2499 = vst [vmem:[#allocation10 + $0x74] sm:$0xf] %v2371
          %2500 = vst [vmem:[#allocation10 + $0x78] sm:$0xf] %v2372
          %2501 = vst [vmem:[#allocation10 + $0x7c] sm:$0xf] %v2373
          %2502 = vst [vmem:[#allocation10 + $0x80] sm:$0xf] %v2374
          %2503 = vst [vmem:[#allocation10 + $0x84] sm:$0xf] %v2375
          %2504 = vst [vmem:[#allocation10 + $0x88] sm:$0xf] %v2376
          %2505 = vst [vmem:[#allocation10 + $0x8c] sm:$0xf] %v2377
          %2506 = vst [vmem:[#allocation10 + $0x90] sm:$0xf] %v2378
          %2507 = vst [vmem:[#allocation10 + $0x94] sm:$0xf] %v2379
          %2508 = vst [vmem:[#allocation10 + $0x98] sm:$0xf] %v2380
          %2509 = vst [vmem:[#allocation10 + $0x9c] sm:$0xf] %v2381
          %2510 = vst [vmem:[#allocation10 + $0xa0] sm:$0xf] %v2382
          %2511 = vst [vmem:[#allocation10 + $0xa4] sm:$0xf] %v2383
          %2512 = vst [vmem:[#allocation10 + $0xa8] sm:$0xf] %v2384
          %2513 = vst [vmem:[#allocation10 + $0xac] sm:$0xf] %v2385
          %2514 = vst [vmem:[#allocation10 + $0xb0] sm:$0xf] %v2386
          %2515 = vst [vmem:[#allocation10 + $0xb4] sm:$0xf] %v2387
          %2516 = vst [vmem:[#allocation10 + $0xb8] sm:$0xf] %v2388
          %2517 = vst [vmem:[#allocation10 + $0xbc] sm:$0xf] %v2389
          %2518 = vst [vmem:[#allocation10 + $0xc0] sm:$0xf] %v2390
          %2519 = vst [vmem:[#allocation10 + $0xc4] sm:$0xf] %v2391
          %2520 = vst [vmem:[#allocation10 + $0xc8] sm:$0xf] %v2392
          %2521 = vst [vmem:[#allocation10 + $0xcc] sm:$0xf] %v2393
          %2522 = vst [vmem:[#allocation10 + $0xd0] sm:$0xf] %v2394
          %2523 = vst [vmem:[#allocation10 + $0xd4] sm:$0xf] %v2395
          %2524 = vst [vmem:[#allocation10 + $0xd8] sm:$0xf] %v2396
          %2525 = vst [vmem:[#allocation10 + $0xdc] sm:$0xf] %v2397
          %2526 = vst [vmem:[#allocation10 + $0xe0] sm:$0xf] %v2398
          %2527 = vst [vmem:[#allocation10 + $0xe4] sm:$0xf] %v2399
          %2528 = vst [vmem:[#allocation10 + $0xe8] sm:$0xf] %v2400
          %2529 = vst [vmem:[#allocation10 + $0xec] sm:$0xf] %v2401
          %2530 = vst [vmem:[#allocation10 + $0xf0] sm:$0xf] %v2402
          %2531 = vst [vmem:[#allocation10 + $0xf4] sm:$0xf] %v2403
          %2532 = vst [vmem:[#allocation10 + $0xf8] sm:$0xf] %v2404
          %2533 = vst [vmem:[#allocation10 + $0xfc] sm:$0xf] %v2405
        $region56: #{gin_layer.1} parent=35 // pred_fallthru
          _
        // Predicated region
        $region57: #{gin_layer.1} parent=35 // pred_check
          %p2534 = pneg %p122
        $region58: #{gin_layer.1} parent=35 // pred_check_branch
          %2536 = sbr.rel (%p2534) target = $region60
        $region59: #{gin_layer.1} parent=35 // pred_region
          %s2538 = ssub.s32 4096, 4096
          %2539 = vsyncadd [#allocation6], %s2538
          %s2540 = sshll.u32 [#allocation10], 4
          %s2541 = int_to_ptr.vmem [resolvable:$true] %s2540
          %2546 = dma.vmem_to_hbm [thread:$0]  %s2541, 4096, %s4, [#allocation6], 64, 64, 4
        $region60: #{gin_layer.1} parent=35 // pred_fallthru
          _
        // Predicated region
        $region61: #{gin_layer.1} parent=35 // pred_check
          %p2547 = pneg %p122
        $region62: #{gin_layer.1} parent=35 // pred_check_branch
          %2549 = sbr.rel (%p2547) target = $region64
        $region63: #{gin_layer.1} parent=35 // pred_region
          %2550 = dma.done [#allocation6], 4096
        $region64: #{gin_layer.1} parent=35 // pred_fallthru
          _
      $region36: #{gin_layer.1} parent=5 // pred_fallthru
        _
      %p2551 = scmp.le.s32.totalorder 2, %s15
      // Predicated region
      $region65: #{gin_layer.1} parent=5 // pred_check
        %p2552 = pneg %p2551
      $region66: #{gin_layer.1} parent=5 // pred_check_branch
        %2554 = sbr.rel (%p2552) target = $region68
      $region67: #{gin_layer.1} parent=5 // pred_region
        %s2555 = ssub.s32 %s15, 2
      $region68: #{gin_layer.1} parent=5 // pred_fallthru
        _
    $region6: #{gin_layer.1} parent=1 // loop_footer
      %s19 = sadd.s32 1, %s15
    $region7: #{gin_layer.1} parent=1 // loop_footer_branch
      %14 = sbr.rel target = $region3
    $region8: #{gin_layer.1} parent=1 // loop_exit
      _
    %2556 = vsyncpa [#allocation5], 1
    %s2557 = scalar_lea.sflag [#allocation5], 1
    %2558 = vsyncpa %s2557, 1
    %2559 = vsyncpa [#allocation8], 1
    %2560 = vsyncpa [#allocation6], 1
    %s2561 = scalar_lea.sflag [#allocation6], 1
    %2562 = vsyncpa %s2561, 1

</llo_original>
